<compile_context>
chip_gen: v7x
topology: tpu7x:2x2x1
jax: 0.10.0
libtpu: 0.0.40
codegen_flags: <defaults>
</compile_context>

<pallas_src>
import functools
import math

import jax
import jax.numpy as jnp
from jax.experimental import pallas as pl
from jax.experimental.pallas import tpu as pltpu


def _bert_selfatt_kernel(x_ref, mask_ref, wqkv_ref, bqkv_ref, wo_ref, bo_ref,
                         gamma_ref, beta_ref, o_ref,
                         q_s, kT_s, v_s, ctx_s,
                         *, num_heads, head_dim, tq, compute_dtype):
    # x_ref:    (1, S, H)   hidden states for one batch element (full sequence)
    # mask_ref: (1, 1, S)   additive attention mask (0 / -10000) over keys
    # wqkv_ref: (H, 3H)     fused [Wq*scale | Wk | Wv] (pre-transposed, compute_dtype)
    # bqkv_ref: (1, 3H)     fused [bq*scale | bk | bv] (f32)
    # wo_ref:   (H, H)      output projection (pre-transposed, compute_dtype)
    # bo/gamma/beta: (1, H) f32
    # o_ref:    (1, tq, H)  output tile (query block)
    # scratch:  q_s (S,H), kT_s (H,S), v_s (S,H), ctx_s (tq,H) in compute_dtype
    H = num_heads * head_dim
    qi = pl.program_id(1)

    # --- once per batch element: fused QKV projection for the whole sequence ---
    @pl.when(qi == 0)
    def _():
        xc = x_ref[0].astype(compute_dtype)                          # (S, H)
        qkv = jnp.dot(xc, wqkv_ref[...],
                      preferred_element_type=jnp.float32)            # (S, 3H) f32
        qkv = (qkv + bqkv_ref[...]).astype(compute_dtype)            # fuse bias+cast
        q_s[...] = qkv[:, 0:H]                                       # scale folded in
        v_s[...] = qkv[:, 2 * H:3 * H]
        kT_s[...] = qkv[:, H:2 * H].T                                # one bulk transpose

    # --- per query tile ---
    row0 = pl.multiple_of(qi * tq, tq)
    x_tile = x_ref[0, pl.ds(row0, tq), :]                            # (tq, H) residual
    q_tile = q_s[pl.ds(row0, tq), :]                                 # (tq, H) compute_dtype
    mask = mask_ref[0]                                               # (1, S) f32

    for h in range(num_heads):
        lo = h * head_dim
        hi = lo + head_dim
        q_h = q_tile[:, lo:hi]                                       # (tq, dh)
        kT_h = kT_s[lo:hi, :]                                        # (dh, S) sublane slice
        v_h = v_s[:, lo:hi]                                          # (S, dh)

        scores = jnp.dot(q_h, kT_h,
                         preferred_element_type=jnp.float32) + mask  # (tq, S) f32
        m = jnp.max(scores, axis=-1, keepdims=True)                  # stable softmax, f32
        p = jnp.exp(scores - m)
        inv = pl.reciprocal(jnp.sum(p, axis=-1, keepdims=True), approx=True)
        # TODO(synk): attention-probs dropout is identity (eval mode); wire
        # pltpu.prng_seed/prng_random_bits here for training-mode dropout.
        ctx = jnp.dot(p.astype(compute_dtype), v_h,
                      preferred_element_type=jnp.float32)            # (tq, dh) f32
        ctx_s[:, lo:hi] = (ctx * inv).astype(compute_dtype)          # static lane offset

    # --- single K=H output projection + bias + residual + LayerNorm (f32) ---
    out = jnp.dot(ctx_s[...], wo_ref[...], preferred_element_type=jnp.float32)
    y = out + bo_ref[...] + x_tile.astype(jnp.float32)
    mean = jnp.mean(y, axis=-1, keepdims=True)
    centered = y - mean
    var = jnp.mean(centered * centered, axis=-1, keepdims=True)
    y_norm = centered * jax.lax.rsqrt(var + 1e-12)
    o_ref[0] = (y_norm * gamma_ref[...] + beta_ref[...]).astype(o_ref.dtype)


def _pick_tq(S):
    # Query-tile size: 256/128 rows for real BERT sequence lengths, full S otherwise.
    for cand in (256, 128):
        if S % cand == 0:
            return cand
    return S


def bert_selfatt_layer(hidden_states, attention_mask, params, num_heads,
                       compute_dtype=jnp.float32):
    """Fused BertSelfattLayer.forward (eval mode).

    hidden_states:  (B, S, H) float32
    attention_mask: (B, 1, 1, S) additive key-padding mask (0 valid / -10000), or None
    params: dict with wq,bq,wk,bk,wv,bv,wo,bo (PyTorch Linear layout: W is (out, in))
            and gamma,beta (LayerNorm).
    compute_dtype:  matmul operand dtype (use jnp.bfloat16 on v5e/v6e/v7x MXU path).
    """
    B, S, H = hidden_states.shape
    assert H % num_heads == 0
    head_dim = H // num_heads
    scale = 1.0 / math.sqrt(head_dim)

    if attention_mask is None:
        mask = jnp.zeros((B, 1, S), jnp.float32)
    else:
        # Only a key-padding mask is supported; a per-query (B,1,S,S) mask would
        # reshape silently and give wrong results.
        assert attention_mask.shape == (B, 1, 1, S), (
            f"expected key-padding mask (B,1,1,S), got {attention_mask.shape}")
        mask = attention_mask.reshape(B, 1, S).astype(jnp.float32)

    # PyTorch nn.Linear computes y = x @ W.T + b; pre-transpose once, fuse QKV,
    # fold the 1/sqrt(head_dim) score scaling into Wq/bq, cast wrapper-side.
    wq = params["wq"].T * scale
    wk = params["wk"].T
    wv = params["wv"].T
    wqkv = jnp.concatenate([wq, wk, wv], axis=1).astype(compute_dtype)   # (H, 3H)
    bqkv = jnp.concatenate([params["bq"] * scale, params["bk"], params["bv"]]
                           ).reshape(1, 3 * H).astype(jnp.float32)
    wo = params["wo"].T.astype(compute_dtype)                            # (H, H)
    bo = params["bo"].reshape(1, H).astype(jnp.float32)
    gamma = params["gamma"].reshape(1, H).astype(jnp.float32)
    beta = params["beta"].reshape(1, H).astype(jnp.float32)

    tq = _pick_tq(S)
    nq = S // tq

    kernel = functools.partial(_bert_selfatt_kernel, num_heads=num_heads,
                               head_dim=head_dim, tq=tq,
                               compute_dtype=compute_dtype)

    def const_spec(shape):
        return pl.BlockSpec(shape, lambda b, qi: (0, 0))

    return pl.pallas_call(
        kernel,
        out_shape=jax.ShapeDtypeStruct((B, S, H), hidden_states.dtype),
        grid=(B, nq),
        in_specs=[
            pl.BlockSpec((1, S, H), lambda b, qi: (b, 0, 0)),   # hidden_states (full seq)
            pl.BlockSpec((1, 1, S), lambda b, qi: (b, 0, 0)),   # additive mask
            const_spec((H, 3 * H)),                             # fused Wqkv
            const_spec((1, 3 * H)),                             # fused bqkv
            const_spec((H, H)),                                 # Wo
            const_spec((1, H)),                                 # bo
            const_spec((1, H)),                                 # gamma
            const_spec((1, H)),                                 # beta
        ],
        out_specs=pl.BlockSpec((1, tq, H), lambda b, qi: (b, qi, 0)),
        scratch_shapes=[
            pltpu.VMEM((S, H), compute_dtype),    # Q  (full sequence, persists per batch)
            pltpu.VMEM((H, S), compute_dtype),    # K^T
            pltpu.VMEM((S, H), compute_dtype),    # V
            pltpu.VMEM((tq, H), compute_dtype),   # per-tile concat(head contexts)
        ],
        compiler_params=pltpu.CompilerParams(
            # batch axis sharded across v7x TensorCores; query-tile axis is
            # "arbitrary" because it reuses the per-batch K/V scratch.
            dimension_semantics=("parallel", "arbitrary")),
    )(hidden_states, mask, wqkv, bqkv, wo, bo, gamma, beta)


def _ref_forward(x, mask4, p, num_heads):
    """Plain-JAX reference matching the PyTorch module (eval mode)."""
    B, S, H = x.shape
    dh = H // num_heads
    q = x @ p["wq"].T + p["bq"]
    k = x @ p["wk"].T + p["bk"]
    v = x @ p["wv"].T + p["bv"]

    def split(t):
        return t.reshape(B, S, num_heads, dh).transpose(0, 2, 1, 3)

    qh, kh, vh = split(q), split(k), split(v)
    scores = jnp.einsum("bhqd,bhkd->bhqk", qh, kh) / math.sqrt(dh)
    scores = scores + mask4
    probs = jax.nn.softmax(scores, axis=-1)
    ctx = jnp.einsum("bhqk,bhkd->bhqd", probs, vh)
    ctx = ctx.transpose(0, 2, 1, 3).reshape(B, S, H)
    out = ctx @ p["wo"].T + p["bo"]
    y = out + x
    mu = y.mean(-1, keepdims=True)
    var = ((y - mu) ** 2).mean(-1, keepdims=True)
    return (y - mu) / jnp.sqrt(var + 1e-12) * p["gamma"] + p["beta"]


if __name__ == "__main__":
    # Small config consistent with the module: hidden=128 (lane-dense blocks),
    # 4 heads (head_dim=32), seq=16, batch=2.
    B, S, H, NH = 2, 16, 128, 4

    key = jax.random.PRNGKey(0)
    keys = jax.random.split(key, 10)
    x = jax.random.normal(keys[0], (B, S, H), dtype=jnp.float32)

    def lin(kw, kb):
        w = jax.random.normal(kw, (H, H), dtype=jnp.float32) * 0.02
        b = jax.random.normal(kb, (H,), dtype=jnp.float32) * 0.02
        return w, b

    wq, bq = lin(keys[1], keys[2])
    wk, bk = lin(keys[3], keys[4])
    wv, bv = lin(keys[5], keys[6])
    wo, bo = lin(keys[7], keys[8])
    params = dict(wq=wq, bq=bq, wk=wk, bk=bk, wv=wv, bv=bv, wo=wo, bo=bo,
                  gamma=jnp.ones((H,), jnp.float32),
                  beta=jnp.zeros((H,), jnp.float32))

    # BERT-style additive padding mask: batch 0 fully valid, batch 1 has 11
    # valid tokens -> (1 - valid) * -10000, shape (B, 1, 1, S).
    lens = jnp.array([S, 11], dtype=jnp.int32)
    valid = (jnp.arange(S)[None, :] < lens[:, None]).astype(jnp.float32)
    attention_mask = (1.0 - valid)[:, None, None, :] * -10000.0

    ref = _ref_forward(x, attention_mask, params, NH)

    # f32 path (matches the PyTorch module's default precision).
    out = bert_selfatt_layer(x, attention_mask, params, NH)
    out = jax.block_until_ready(out)
    assert out.shape == (B, S, H)
    err = float(jnp.max(jnp.abs(out - ref)))
    # Tolerance absorbs MXU f32 precision modes and the approx EUP reciprocal.
    assert err < 2e-2, f"f32 kernel mismatch: max abs err {err}"

    # bf16-operand MXU path (v5e/v6e/v7x); softmax + LayerNorm stay f32 in-kernel.
    out_bf16 = bert_selfatt_layer(x, attention_mask, params, NH,
                                  compute_dtype=jnp.bfloat16)
    out_bf16 = jax.block_until_ready(out_bf16)
    err16 = float(jnp.max(jnp.abs(out_bf16 - ref)))
    assert err16 < 1e-1, f"bf16 kernel mismatch: max abs err {err16}"

    print("KERNEL_OK")
</pallas_src>

<mosaic_0001>
module attributes {stable_mosaic.version = 11 : i64} {
  func.func @_bert_selfatt_kernel(%arg0: i32, %arg1: i32, %arg2: memref<1x16x128xf32, #tpu.memory_space<vmem>>, %arg3: memref<1x1x16xf32, #tpu.memory_space<vmem>>, %arg4: memref<128x384xf32, #tpu.memory_space<vmem>>, %arg5: memref<1x384xf32, #tpu.memory_space<vmem>>, %arg6: memref<128x128xf32, #tpu.memory_space<vmem>>, %arg7: memref<1x128xf32, #tpu.memory_space<vmem>>, %arg8: memref<1x128xf32, #tpu.memory_space<vmem>>, %arg9: memref<1x128xf32, #tpu.memory_space<vmem>>, %arg10: memref<1x16x128xf32, #tpu.memory_space<vmem>>, %arg11: memref<16x128xf32, #tpu.memory_space<vmem>>, %arg12: memref<128x16xf32, #tpu.memory_space<vmem>>, %arg13: memref<16x128xf32, #tpu.memory_space<vmem>>, %arg14: memref<16x128xf32, #tpu.memory_space<vmem>>) attributes {dimension_semantics = [#tpu.dimension_semantics<parallel>, #tpu.dimension_semantics<arbitrary>], iteration_bounds = array<i64: 2, 1>, scalar_prefetch = 0 : i64, scratch_operands = 4 : i64, tpu.core_type = #tpu.core_type<tc>, window_params = [{transform_indices = @transform_0, window_bounds = array<i64: 1, 16, 128>}, {transform_indices = @transform_1, window_bounds = array<i64: 1, 1, 16>}, {pipeline_mode = #tpu.pipeline_mode<synchronous>, transform_indices = @transform_2, window_bounds = array<i64: 128, 384>}, {pipeline_mode = #tpu.pipeline_mode<synchronous>, transform_indices = @transform_3, window_bounds = array<i64: 1, 384>}, {pipeline_mode = #tpu.pipeline_mode<synchronous>, transform_indices = @transform_4, window_bounds = array<i64: 128, 128>}, {pipeline_mode = #tpu.pipeline_mode<synchronous>, transform_indices = @transform_5, window_bounds = array<i64: 1, 128>}, {pipeline_mode = #tpu.pipeline_mode<synchronous>, transform_indices = @transform_6, window_bounds = array<i64: 1, 128>}, {pipeline_mode = #tpu.pipeline_mode<synchronous>, transform_indices = @transform_7, window_bounds = array<i64: 1, 128>}, {transform_indices = @transform_8, window_bounds = array<i64: 1, 16, 128>}]} {
    %c0_i32 = arith.constant 0 : i32
    %0 = arith.cmpi eq, %arg1, %c0_i32 : i32
    %1 = arith.extui %0 : i1 to i32
    %c0_i32_0 = arith.constant 0 : i32
    %2 = arith.cmpi ne, %1, %c0_i32_0 : i32
    scf.if %2 {
      %c0_61 = arith.constant 0 : index
      %c0_62 = arith.constant 0 : index
      %c0_63 = arith.constant 0 : index
      %116 = vector.load %arg2[%c0_61, %c0_62, %c0_63] : memref<1x16x128xf32, #tpu.memory_space<vmem>>, vector<1x16x128xf32>
      %117 = vector.shape_cast %116 : vector<1x16x128xf32> to vector<16x128xf32>
      %c0_64 = arith.constant 0 : index
      %c0_65 = arith.constant 0 : index
      %118 = vector.load %arg4[%c0_64, %c0_65] : memref<128x384xf32, #tpu.memory_space<vmem>>, vector<128x384xf32>
      %cst_66 = arith.constant dense<0.000000e+00> : vector<16x384xf32>
      %119 = tpu.matmul %117, %118, %cst_66 {dimension_numbers = #tpu.dot_dimension_numbers<[1], [0], [0], [1], [0, 0, 1, 1], [], []>} : vector<16x128xf32>, vector<128x384xf32>, vector<16x384xf32> -> vector<16x384xf32>
      %c0_67 = arith.constant 0 : index
      %c0_68 = arith.constant 0 : index
      %120 = vector.load %arg5[%c0_67, %c0_68] : memref<1x384xf32, #tpu.memory_space<vmem>>, vector<1x384xf32>
      %121 = vector.broadcast %120 : vector<1x384xf32> to vector<16x384xf32>
      %122 = arith.addf %119, %121 : vector<16x384xf32>
      %123 = vector.extract_strided_slice %122 {offsets = [0, 0], sizes = [16, 128], strides = [1, 1]} : vector<16x384xf32> to vector<16x128xf32>
      %c0_69 = arith.constant 0 : index
      %c0_70 = arith.constant 0 : index
      %124 = vector.load %arg11[%c0_69, %c0_70] : memref<16x128xf32, #tpu.memory_space<vmem>>, vector<16x128xf32>
      tpu.vector_store %arg11[%c0_69, %c0_70], %123 {strides = array<i32>} : memref<16x128xf32, #tpu.memory_space<vmem>>, vector<16x128xf32>,
      %125 = vector.extract_strided_slice %122 {offsets = [0, 256], sizes = [16, 128], strides = [1, 1]} : vector<16x384xf32> to vector<16x128xf32>
      %c0_71 = arith.constant 0 : index
      %c0_72 = arith.constant 0 : index
      %126 = vector.load %arg13[%c0_71, %c0_72] : memref<16x128xf32, #tpu.memory_space<vmem>>, vector<16x128xf32>
      tpu.vector_store %arg13[%c0_71, %c0_72], %125 {strides = array<i32>} : memref<16x128xf32, #tpu.memory_space<vmem>>, vector<16x128xf32>,
      %127 = vector.extract_strided_slice %122 {offsets = [0, 128], sizes = [16, 128], strides = [1, 1]} : vector<16x384xf32> to vector<16x128xf32>
      %128 = tpu.transpose %127, [1, 0] : vector<16x128xf32> -> vector<128x16xf32>
      %c0_73 = arith.constant 0 : index
      %c0_74 = arith.constant 0 : index
      %129 = vector.load %arg12[%c0_73, %c0_74] : memref<128x16xf32, #tpu.memory_space<vmem>>, vector<128x16xf32>
      tpu.vector_store %arg12[%c0_73, %c0_74], %128 {strides = array<i32>} : memref<128x16xf32, #tpu.memory_space<vmem>>, vector<128x16xf32>,
    } else {
    }
    %c16_i32 = arith.constant 16 : i32
    %3 = arith.muli %arg1, %c16_i32 : i32
    %4 = tpu.assume_multiple %3, 16 : i32
    %c0 = arith.constant 0 : index
    %5 = arith.index_cast %4 : i32 to index
    %c0_1 = arith.constant 0 : index
    %6 = vector.load %arg2[%c0, %5, %c0_1] : memref<1x16x128xf32, #tpu.memory_space<vmem>>, vector<1x16x128xf32>
    %7 = vector.shape_cast %6 : vector<1x16x128xf32> to vector<16x128xf32>
    %8 = arith.index_cast %4 : i32 to index
    %c0_2 = arith.constant 0 : index
    %9 = vector.load %arg11[%8, %c0_2] : memref<16x128xf32, #tpu.memory_space<vmem>>, vector<16x128xf32>
    %c0_3 = arith.constant 0 : index
    %c0_4 = arith.constant 0 : index
    %c0_5 = arith.constant 0 : index
    %10 = vector.load %arg3[%c0_3, %c0_4, %c0_5] : memref<1x1x16xf32, #tpu.memory_space<vmem>>, vector<1x1x16xf32>
    %11 = vector.shape_cast %10 : vector<1x1x16xf32> to vector<1x16xf32>
    %12 = vector.extract_strided_slice %9 {offsets = [0, 0], sizes = [16, 32], strides = [1, 1]} : vector<16x128xf32> to vector<16x32xf32>
    %c0_6 = arith.constant 0 : index
    %c0_7 = arith.constant 0 : index
    %13 = vector.load %arg12[%c0_6, %c0_7] : memref<128x16xf32, #tpu.memory_space<vmem>>, vector<32x16xf32>
    %c0_8 = arith.constant 0 : index
    %c0_9 = arith.constant 0 : index
    %14 = vector.load %arg13[%c0_8, %c0_9] : memref<16x128xf32, #tpu.memory_space<vmem>>, vector<16x32xf32>
    %cst = arith.constant dense<0.000000e+00> : vector<16x16xf32>
    %15 = tpu.matmul %12, %13, %cst {dimension_numbers = #tpu.dot_dimension_numbers<[1], [0], [0], [1], [0, 0, 1, 1], [], []>} : vector<16x32xf32>, vector<32x16xf32>, vector<16x16xf32> -> vector<16x16xf32>
    %16 = vector.broadcast %11 : vector<1x16xf32> to vector<16x16xf32>
    %17 = arith.addf %15, %16 : vector<16x16xf32>
    %cst_10 = arith.constant dense<0xFF800000> : vector<16xf32>
    %18 = vector.multi_reduction <maximumf>, %17, %cst_10 [1] : vector<16x16xf32> to vector<16xf32>
    %19 = vector.shape_cast %18 : vector<16xf32> to vector<16x1xf32>
    %20 = vector.broadcast %19 : vector<16x1xf32> to vector<16x16xf32>
    %21 = arith.subf %17, %20 : vector<16x16xf32>
    %22 = math.exp %21 : vector<16x16xf32>
    %cst_11 = arith.constant dense<0.000000e+00> : vector<16xf32>
    %23 = vector.multi_reduction <add>, %22, %cst_11 [1] : vector<16x16xf32> to vector<16xf32>
    %24 = vector.shape_cast %23 : vector<16xf32> to vector<16x1xf32>
    %25 = tpu.reciprocal %24 {approx = true} : vector<16x1xf32> -> vector<16x1xf32>
    %cst_12 = arith.constant dense<0.000000e+00> : vector<16x32xf32>
    %26 = tpu.matmul %22, %14, %cst_12 {dimension_numbers = #tpu.dot_dimension_numbers<[1], [0], [0], [1], [0, 0, 1, 1], [], []>} : vector<16x16xf32>, vector<16x32xf32>, vector<16x32xf32> -> vector<16x32xf32>
    %27 = vector.broadcast %25 : vector<16x1xf32> to vector<16x32xf32>
    %28 = arith.mulf %26, %27 : vector<16x32xf32>
    %c0_13 = arith.constant 0 : index
    %c0_14 = arith.constant 0 : index
    %29 = vector.load %arg14[%c0_13, %c0_14] : memref<16x128xf32, #tpu.memory_space<vmem>>, vector<16x32xf32>
    tpu.vector_store %arg14[%c0_13, %c0_14], %28 {strides = array<i32>} : memref<16x128xf32, #tpu.memory_space<vmem>>, vector<16x32xf32>,
    %30 = vector.extract_strided_slice %9 {offsets = [0, 32], sizes = [16, 32], strides = [1, 1]} : vector<16x128xf32> to vector<16x32xf32>
    %c32 = arith.constant 32 : index
    %c0_15 = arith.constant 0 : index
    %31 = vector.load %arg12[%c32, %c0_15] : memref<128x16xf32, #tpu.memory_space<vmem>>, vector<32x16xf32>
    %c0_16 = arith.constant 0 : index
    %c32_17 = arith.constant 32 : index
    %32 = vector.load %arg13[%c0_16, %c32_17] : memref<16x128xf32, #tpu.memory_space<vmem>>, vector<16x32xf32>
    %cst_18 = arith.constant dense<0.000000e+00> : vector<16x16xf32>
    %33 = tpu.matmul %30, %31, %cst_18 {dimension_numbers = #tpu.dot_dimension_numbers<[1], [0], [0], [1], [0, 0, 1, 1], [], []>} : vector<16x32xf32>, vector<32x16xf32>, vector<16x16xf32> -> vector<16x16xf32>
    %34 = vector.broadcast %11 : vector<1x16xf32> to vector<16x16xf32>
    %35 = arith.addf %33, %34 : vector<16x16xf32>
    %cst_19 = arith.constant dense<0xFF800000> : vector<16xf32>
    %36 = vector.multi_reduction <maximumf>, %35, %cst_19 [1] : vector<16x16xf32> to vector<16xf32>
    %37 = vector.shape_cast %36 : vector<16xf32> to vector<16x1xf32>
    %38 = vector.broadcast %37 : vector<16x1xf32> to vector<16x16xf32>
    %39 = arith.subf %35, %38 : vector<16x16xf32>
    %40 = math.exp %39 : vector<16x16xf32>
    %cst_20 = arith.constant dense<0.000000e+00> : vector<16xf32>
    %41 = vector.multi_reduction <add>, %40, %cst_20 [1] : vector<16x16xf32> to vector<16xf32>
    %42 = vector.shape_cast %41 : vector<16xf32> to vector<16x1xf32>
    %43 = tpu.reciprocal %42 {approx = true} : vector<16x1xf32> -> vector<16x1xf32>
    %cst_21 = arith.constant dense<0.000000e+00> : vector<16x32xf32>
    %44 = tpu.matmul %40, %32, %cst_21 {dimension_numbers = #tpu.dot_dimension_numbers<[1], [0], [0], [1], [0, 0, 1, 1], [], []>} : vector<16x16xf32>, vector<16x32xf32>, vector<16x32xf32> -> vector<16x32xf32>
    %45 = vector.broadcast %43 : vector<16x1xf32> to vector<16x32xf32>
    %46 = arith.mulf %44, %45 : vector<16x32xf32>
    %c0_22 = arith.constant 0 : index
    %c32_23 = arith.constant 32 : index
    %47 = vector.load %arg14[%c0_22, %c32_23] : memref<16x128xf32, #tpu.memory_space<vmem>>, vector<16x32xf32>
    tpu.vector_store %arg14[%c0_22, %c32_23], %46 {strides = array<i32>} : memref<16x128xf32, #tpu.memory_space<vmem>>, vector<16x32xf32>,
    %48 = vector.extract_strided_slice %9 {offsets = [0, 64], sizes = [16, 32], strides = [1, 1]} : vector<16x128xf32> to vector<16x32xf32>
    %c64 = arith.constant 64 : index
    %c0_24 = arith.constant 0 : index
    %49 = vector.load %arg12[%c64, %c0_24] : memref<128x16xf32, #tpu.memory_space<vmem>>, vector<32x16xf32>
    %c0_25 = arith.constant 0 : index
    %c64_26 = arith.constant 64 : index
    %50 = vector.load %arg13[%c0_25, %c64_26] : memref<16x128xf32, #tpu.memory_space<vmem>>, vector<16x32xf32>
    %cst_27 = arith.constant dense<0.000000e+00> : vector<16x16xf32>
    %51 = tpu.matmul %48, %49, %cst_27 {dimension_numbers = #tpu.dot_dimension_numbers<[1], [0], [0], [1], [0, 0, 1, 1], [], []>} : vector<16x32xf32>, vector<32x16xf32>, vector<16x16xf32> -> vector<16x16xf32>
    %52 = vector.broadcast %11 : vector<1x16xf32> to vector<16x16xf32>
    %53 = arith.addf %51, %52 : vector<16x16xf32>
    %cst_28 = arith.constant dense<0xFF800000> : vector<16xf32>
    %54 = vector.multi_reduction <maximumf>, %53, %cst_28 [1] : vector<16x16xf32> to vector<16xf32>
    %55 = vector.shape_cast %54 : vector<16xf32> to vector<16x1xf32>
    %56 = vector.broadcast %55 : vector<16x1xf32> to vector<16x16xf32>
    %57 = arith.subf %53, %56 : vector<16x16xf32>
    %58 = math.exp %57 : vector<16x16xf32>
    %cst_29 = arith.constant dense<0.000000e+00> : vector<16xf32>
    %59 = vector.multi_reduction <add>, %58, %cst_29 [1] : vector<16x16xf32> to vector<16xf32>
    %60 = vector.shape_cast %59 : vector<16xf32> to vector<16x1xf32>
    %61 = tpu.reciprocal %60 {approx = true} : vector<16x1xf32> -> vector<16x1xf32>
    %cst_30 = arith.constant dense<0.000000e+00> : vector<16x32xf32>
    %62 = tpu.matmul %58, %50, %cst_30 {dimension_numbers = #tpu.dot_dimension_numbers<[1], [0], [0], [1], [0, 0, 1, 1], [], []>} : vector<16x16xf32>, vector<16x32xf32>, vector<16x32xf32> -> vector<16x32xf32>
    %63 = vector.broadcast %61 : vector<16x1xf32> to vector<16x32xf32>
    %64 = arith.mulf %62, %63 : vector<16x32xf32>
    %c0_31 = arith.constant 0 : index
    %c64_32 = arith.constant 64 : index
    %65 = vector.load %arg14[%c0_31, %c64_32] : memref<16x128xf32, #tpu.memory_space<vmem>>, vector<16x32xf32>
    tpu.vector_store %arg14[%c0_31, %c64_32], %64 {strides = array<i32>} : memref<16x128xf32, #tpu.memory_space<vmem>>, vector<16x32xf32>,
    %66 = vector.extract_strided_slice %9 {offsets = [0, 96], sizes = [16, 32], strides = [1, 1]} : vector<16x128xf32> to vector<16x32xf32>
    %c96 = arith.constant 96 : index
    %c0_33 = arith.constant 0 : index
    %67 = vector.load %arg12[%c96, %c0_33] : memref<128x16xf32, #tpu.memory_space<vmem>>, vector<32x16xf32>
    %c0_34 = arith.constant 0 : index
    %c96_35 = arith.constant 96 : index
    %68 = vector.load %arg13[%c0_34, %c96_35] : memref<16x128xf32, #tpu.memory_space<vmem>>, vector<16x32xf32>
    %cst_36 = arith.constant dense<0.000000e+00> : vector<16x16xf32>
    %69 = tpu.matmul %66, %67, %cst_36 {dimension_numbers = #tpu.dot_dimension_numbers<[1], [0], [0], [1], [0, 0, 1, 1], [], []>} : vector<16x32xf32>, vector<32x16xf32>, vector<16x16xf32> -> vector<16x16xf32>
    %70 = vector.broadcast %11 : vector<1x16xf32> to vector<16x16xf32>
    %71 = arith.addf %69, %70 : vector<16x16xf32>
    %cst_37 = arith.constant dense<0xFF800000> : vector<16xf32>
    %72 = vector.multi_reduction <maximumf>, %71, %cst_37 [1] : vector<16x16xf32> to vector<16xf32>
    %73 = vector.shape_cast %72 : vector<16xf32> to vector<16x1xf32>
    %74 = vector.broadcast %73 : vector<16x1xf32> to vector<16x16xf32>
    %75 = arith.subf %71, %74 : vector<16x16xf32>
    %76 = math.exp %75 : vector<16x16xf32>
    %cst_38 = arith.constant dense<0.000000e+00> : vector<16xf32>
    %77 = vector.multi_reduction <add>, %76, %cst_38 [1] : vector<16x16xf32> to vector<16xf32>
    %78 = vector.shape_cast %77 : vector<16xf32> to vector<16x1xf32>
    %79 = tpu.reciprocal %78 {approx = true} : vector<16x1xf32> -> vector<16x1xf32>
    %cst_39 = arith.constant dense<0.000000e+00> : vector<16x32xf32>
    %80 = tpu.matmul %76, %68, %cst_39 {dimension_numbers = #tpu.dot_dimension_numbers<[1], [0], [0], [1], [0, 0, 1, 1], [], []>} : vector<16x16xf32>, vector<16x32xf32>, vector<16x32xf32> -> vector<16x32xf32>
    %81 = vector.broadcast %79 : vector<16x1xf32> to vector<16x32xf32>
    %82 = arith.mulf %80, %81 : vector<16x32xf32>
    %c0_40 = arith.constant 0 : index
    %c96_41 = arith.constant 96 : index
    %83 = vector.load %arg14[%c0_40, %c96_41] : memref<16x128xf32, #tpu.memory_space<vmem>>, vector<16x32xf32>
    tpu.vector_store %arg14[%c0_40, %c96_41], %82 {strides = array<i32>} : memref<16x128xf32, #tpu.memory_space<vmem>>, vector<16x32xf32>,
    %c0_42 = arith.constant 0 : index
    %c0_43 = arith.constant 0 : index
    %84 = vector.load %arg14[%c0_42, %c0_43] : memref<16x128xf32, #tpu.memory_space<vmem>>, vector<16x128xf32>
    %c0_44 = arith.constant 0 : index
    %c0_45 = arith.constant 0 : index
    %85 = vector.load %arg6[%c0_44, %c0_45] : memref<128x128xf32, #tpu.memory_space<vmem>>, vector<128x128xf32>
    %cst_46 = arith.constant dense<0.000000e+00> : vector<16x128xf32>
    %86 = tpu.matmul %84, %85, %cst_46 {dimension_numbers = #tpu.dot_dimension_numbers<[1], [0], [0], [1], [0, 0, 1, 1], [], []>} : vector<16x128xf32>, vector<128x128xf32>, vector<16x128xf32> -> vector<16x128xf32>
    %c0_47 = arith.constant 0 : index
    %c0_48 = arith.constant 0 : index
    %87 = vector.load %arg7[%c0_47, %c0_48] : memref<1x128xf32, #tpu.memory_space<vmem>>, vector<1x128xf32>
    %88 = vector.broadcast %87 : vector<1x128xf32> to vector<16x128xf32>
    %89 = arith.addf %86, %88 : vector<16x128xf32>
    %90 = arith.addf %89, %7 : vector<16x128xf32>
    %cst_49 = arith.constant dense<0.000000e+00> : vector<16xf32>
    %91 = vector.multi_reduction <add>, %90, %cst_49 [1] : vector<16x128xf32> to vector<16xf32>
    %92 = vector.shape_cast %91 : vector<16xf32> to vector<16x1xf32>
    %cst_50 = arith.constant 1.280000e+02 : f32
    %93 = vector.broadcast %cst_50 : f32 to vector<16x1xf32>
    %94 = arith.divf %92, %93 : vector<16x1xf32>
    %95 = vector.broadcast %94 : vector<16x1xf32> to vector<16x128xf32>
    %96 = arith.subf %90, %95 : vector<16x128xf32>
    %97 = arith.mulf %96, %96 : vector<16x128xf32>
    %cst_51 = arith.constant dense<0.000000e+00> : vector<16xf32>
    %98 = vector.multi_reduction <add>, %97, %cst_51 [1] : vector<16x128xf32> to vector<16xf32>
    %99 = vector.shape_cast %98 : vector<16xf32> to vector<16x1xf32>
    %cst_52 = arith.constant 1.280000e+02 : f32
    %100 = vector.broadcast %cst_52 : f32 to vector<16x1xf32>
    %101 = arith.divf %99, %100 : vector<16x1xf32>
    %cst_53 = arith.constant 9.99999996E-13 : f32
    %102 = vector.broadcast %cst_53 : f32 to vector<16x1xf32>
    %103 = arith.addf %101, %102 : vector<16x1xf32>
    %104 = math.rsqrt %103 : vector<16x1xf32>
    %105 = vector.broadcast %104 : vector<16x1xf32> to vector<16x128xf32>
    %106 = arith.mulf %96, %105 : vector<16x128xf32>
    %c0_54 = arith.constant 0 : index
    %c0_55 = arith.constant 0 : index
    %107 = vector.load %arg8[%c0_54, %c0_55] : memref<1x128xf32, #tpu.memory_space<vmem>>, vector<1x128xf32>
    %108 = vector.broadcast %107 : vector<1x128xf32> to vector<16x128xf32>
    %109 = arith.mulf %106, %108 : vector<16x128xf32>
    %c0_56 = arith.constant 0 : index
    %c0_57 = arith.constant 0 : index
    %110 = vector.load %arg9[%c0_56, %c0_57] : memref<1x128xf32, #tpu.memory_space<vmem>>, vector<1x128xf32>
    %111 = vector.broadcast %110 : vector<1x128xf32> to vector<16x128xf32>
    %112 = arith.addf %109, %111 : vector<16x128xf32>
    %c0_58 = arith.constant 0 : index
    %c0_59 = arith.constant 0 : index
    %c0_60 = arith.constant 0 : index
    %113 = vector.load %arg10[%c0_58, %c0_59, %c0_60] : memref<1x16x128xf32, #tpu.memory_space<vmem>>, vector<1x16x128xf32>
    %114 = vector.shape_cast %113 : vector<1x16x128xf32> to vector<16x128xf32>
    %115 = vector.shape_cast %112 : vector<16x128xf32> to vector<1x16x128xf32>
    tpu.vector_store %arg10[%c0_58, %c0_59, %c0_60], %115 {strides = array<i32>} : memref<1x16x128xf32, #tpu.memory_space<vmem>>, vector<1x16x128xf32>,
    return
  }
  func.func @transform_0(%arg0: i32, %arg1: i32) -> (i32, i32, i32) {
    %c0_i32 = arith.constant 0 : i32
    %c0_i32_0 = arith.constant 0 : i32
    %c0_i32_1 = arith.constant 0 : i32
    return %arg0, %c0_i32, %c0_i32_0 : i32, i32, i32
  }
  func.func @transform_1(%arg0: i32, %arg1: i32) -> (i32, i32, i32) {
    %c0_i32 = arith.constant 0 : i32
    %c0_i32_0 = arith.constant 0 : i32
    %c0_i32_1 = arith.constant 0 : i32
    return %arg0, %c0_i32, %c0_i32_0 : i32, i32, i32
  }
  func.func @transform_2(%arg0: i32, %arg1: i32) -> (i32, i32) {
    %c0_i32 = arith.constant 0 : i32
    %c0_i32_0 = arith.constant 0 : i32
    %c0_i32_1 = arith.constant 0 : i32
    return %c0_i32, %c0_i32_0 : i32, i32
  }
  func.func @transform_3(%arg0: i32, %arg1: i32) -> (i32, i32) {
    %c0_i32 = arith.constant 0 : i32
    %c0_i32_0 = arith.constant 0 : i32
    %c0_i32_1 = arith.constant 0 : i32
    return %c0_i32, %c0_i32_0 : i32, i32
  }
  func.func @transform_4(%arg0: i32, %arg1: i32) -> (i32, i32) {
    %c0_i32 = arith.constant 0 : i32
    %c0_i32_0 = arith.constant 0 : i32
    %c0_i32_1 = arith.constant 0 : i32
    return %c0_i32, %c0_i32_0 : i32, i32
  }
  func.func @transform_5(%arg0: i32, %arg1: i32) -> (i32, i32) {
    %c0_i32 = arith.constant 0 : i32
    %c0_i32_0 = arith.constant 0 : i32
    %c0_i32_1 = arith.constant 0 : i32
    return %c0_i32, %c0_i32_0 : i32, i32
  }
  func.func @transform_6(%arg0: i32, %arg1: i32) -> (i32, i32) {
    %c0_i32 = arith.constant 0 : i32
    %c0_i32_0 = arith.constant 0 : i32
    %c0_i32_1 = arith.constant 0 : i32
    return %c0_i32, %c0_i32_0 : i32, i32
  }
  func.func @transform_7(%arg0: i32, %arg1: i32) -> (i32, i32) {
    %c0_i32 = arith.constant 0 : i32
    %c0_i32_0 = arith.constant 0 : i32
    %c0_i32_1 = arith.constant 0 : i32
    return %c0_i32, %c0_i32_0 : i32, i32
  }
  func.func @transform_8(%arg0: i32, %arg1: i32) -> (i32, i32, i32) {
    %c0_i32 = arith.constant 0 : i32
    %c0_i32_0 = arith.constant 0 : i32
    return %arg0, %arg1, %c0_i32 : i32, i32, i32
  }
}

</mosaic_0001>

<llo_original>
// kernel: tpu_custom_call.1
$region0: #{tpu_custom_call.1}
  #allocation0 [shape = 'u32[]', space=smem, size = 0x4, offset = 0x4, fixed_abs, tag = 'smem constant byte address 0x4 - core index']
  #allocation1 [shape = 'u32[144,128]{1,0:T(1,128)}', space=vmem, size = 0x12000, scoped, tag = 'internal scratch']
  #allocation2 [shape = 'f32[16,128]{1,0:T(8,128)}', space=vmem, size = 0x2000, scoped, tag = 'scratch operand']
  #allocation3 [shape = 'f32[128,16]{1,0:T(8,128)}', space=vmem, size = 0x10000, scoped, tag = 'scratch operand']
  #allocation4 [shape = 'f32[16,128]{1,0:T(8,128)}', space=vmem, size = 0x2000, scoped, tag = 'scratch operand']
  #allocation5 [shape = 'f32[16,128]{1,0:T(8,128)}', space=vmem, size = 0x2000, scoped, tag = 'scratch operand']
  %s0 = inlined_call_operand.hbm [shape: f32[2,16,128], index: 0, kind: input, shape index: {}]
  %s1 = inlined_call_operand.vmem [shape: f32[2,1,16], index: 1, kind: input, shape index: {}]
  %s2 = inlined_call_operand.hbm [shape: f32[128,384], index: 2, kind: input, shape index: {}]
  %s3 = inlined_call_operand.vmem [shape: f32[1,384], index: 3, kind: input, shape index: {}]
  %s4 = inlined_call_operand.hbm [shape: f32[128,128], index: 4, kind: input, shape index: {}]
  %s5 = inlined_call_operand.vmem [shape: f32[1,128], index: 5, kind: input, shape index: {}]
  %s6 = inlined_call_operand.vmem [shape: f32[1,128], index: 6, kind: input, shape index: {}]
  %s7 = inlined_call_operand.vmem [shape: f32[1,128], index: 7, kind: input, shape index: {}]
  %s8 = inlined_call_operand.hbm [shape: f32[2,16,128], index: 8, kind: output, shape index: {}]
  %s9 = sld [smem:[#allocation0]]
  $region81: #{tpu_custom_call.1} parent=0
    _
  %s11 = ssub.s32 1, %s9
  %s12 = scalar_select 0, %s11, %s9
  $region1: #{tpu_custom_call.1} parent=0
    #allocation6 [shape = 'u8[16384]{0}', space=vmem, size = 0x4000, scoped, tag = 'input window, operand 0']
    #allocation7 [shape = 's32[2]{0}', space=sflag, size = 0x8, scoped, tag = 'scoped memory for tpu_custom_call.1']
    #allocation8 [shape = 's32[2]{0}', space=sflag, size = 0x8, scoped, tag = 'scoped memory for tpu_custom_call.1']
    #allocation9 [shape = 'u8[196608]{0}', space=vmem, size = 0x30000, scoped, tag = 'input window, operand 2, single buffered']
    #allocation10 [shape = 's32[1]{0}', space=sflag, size = 0x4, scoped, tag = 'scoped memory for tpu_custom_call.1']
    #allocation11 [shape = 'u8[65536]{0}', space=vmem, size = 0x10000, scoped, tag = 'input window, operand 4, single buffered']
    #allocation12 [shape = 'u8[16384]{0}', space=vmem, size = 0x4000, scoped, tag = 'output window, operand 0']
    %13 = vsyncpa [#allocation7], 0
    %s14 = scalar_lea.sflag [#allocation7], 1
    %15 = vsyncpa %s14, 0
    %16 = vsyncpa [#allocation10], 0
    %17 = vsyncpa [#allocation8], 0
    %s18 = scalar_lea.sflag [#allocation8], 1
    %19 = vsyncpa %s18, 0
    loop: start=0, step=1, limit=4
    $region2: #{tpu_custom_call.1} parent=1 // loop_pre_header
      _
    $region3: #{tpu_custom_call.1} parent=1 // loop_header
      %s21 = sphi 0, %s25
      %p22 = scmp.ge.s32.totalorder %s21, 4
      %s28 = sphi 0, %s40
      %s29 = sphi 0, %s36
      %s30 = sphi 0, %s28
      %s31 = sphi 0, %s29
      %s32 = sphi 0, %s30
      %s33 = sphi 0, %s31
      %s43 = sphi 0, %s45
      %s46 = sphi 0, %s43
      %s47 = sphi 0, %s46
      %s63 = sphi 0, %s47
      %s69 = sphi 0, %s71
      %s72 = sphi 0, %s69
      %s73 = sphi 0, %s72
      %s89 = sphi 0, %s73
      %s93 = sphi 0, %s93
      %s95 = sphi 0, %s93
      %s96 = sphi 0, %s95
      %s110 = sphi 0, %s96
      %s114 = sphi 0, %s114
      %s116 = sphi 0, %s114
      %s117 = sphi 0, %s116
      %s131 = sphi 0, %s117
      %s135 = sphi 0, %s135
      %s137 = sphi 0, %s135
      %s138 = sphi 0, %s137
      %s152 = sphi 0, %s138
      %s156 = sphi 0, %s156
      %s158 = sphi 0, %s156
      %s159 = sphi 0, %s158
      %s173 = sphi 0, %s159
      %s177 = sphi 0, %s177
      %s179 = sphi 0, %s177
      %s180 = sphi 0, %s179
      %s194 = sphi 0, %s180
      %s198 = sphi 0, %s198
      %s200 = sphi 0, %s198
      %s201 = sphi 0, %s200
      %s215 = sphi 0, %s201
      %s223 = sphi 0, %s225
      %s226 = sphi 0, %s223
      %s227 = sphi 0, %s226
      %s243 = sphi 0, %s227
    $region4: #{tpu_custom_call.1} parent=1 // loop_header_branch
      %24 = sbr.rel (%p22) target = $region8
    $region5: #{tpu_custom_call.1} parent=1 // loop_body
      %s26 = ssub.s32 %s21, 1
      %s27 = ssub.s32 %s21, 2
      %s34 = sadd.s32 1, %s29
      %p35 = scmp.ge.s32.totalorder %s34, 1
      %s36 = scalar_select %p35, 0, %s34
      %s37 = sadd.s32 1, %s28
      %s38 = scalar_select %p35, %s37, %s28
      %p39 = scmp.ge.s32.totalorder %s38, 2
      %s40 = scalar_select %p39, 0, %s38
      %s41 = ssub.s32 %s28, %s40
      %p42 = scmp.eq.s32.totalorder %s41, 0
      %s44 = sadd.s32 %s43, 1
      %s45 = scalar_select %p42, %s43, %s44
      %p48 = pneg %p42
      %p49 = scmp.eq.s32.totalorder %s21, 1
      %p50 = por %p48, %p49
      %p51 = scmp.ne.s32.totalorder %s43, %s46
      %p52 = scmp.eq.s32.totalorder %s21, 0
      %p53 = por %p51, %p52
      %p54 = scmp.ne.s32.totalorder %s43, %s46
      %p55 = scmp.eq.s32.totalorder %s26, 1
      %p56 = por %p54, %p55
      %p57 = scmp.ne.s32.totalorder %s46, %s47
      %p58 = scmp.eq.s32.totalorder %s26, 0
      %p59 = por %p57, %p58
      %p60 = scmp.ne.s32.totalorder %s46, %s47
      %p61 = scmp.eq.s32.totalorder %s27, 1
      %p62 = por %p60, %p61
      %p64 = scmp.ne.s32.totalorder %s47, %s63
      %p65 = scmp.eq.s32.totalorder %s27, 0
      %p66 = por %p64, %p65
      %s67 = ssub.s32 %s28, %s40
      %p68 = scmp.eq.s32.totalorder %s67, 0
      %s70 = sadd.s32 %s69, 1
      %s71 = scalar_select %p68, %s69, %s70
      %p74 = pneg %p68
      %p75 = scmp.eq.s32.totalorder %s21, 1
      %p76 = por %p74, %p75
      %p77 = scmp.ne.s32.totalorder %s69, %s72
      %p78 = scmp.eq.s32.totalorder %s21, 0
      %p79 = por %p77, %p78
      %p80 = scmp.ne.s32.totalorder %s69, %s72
      %p81 = scmp.eq.s32.totalorder %s26, 1
      %p82 = por %p80, %p81
      %p83 = scmp.ne.s32.totalorder %s72, %s73
      %p84 = scmp.eq.s32.totalorder %s26, 0
      %p85 = por %p83, %p84
      %p86 = scmp.ne.s32.totalorder %s72, %s73
      %p87 = scmp.eq.s32.totalorder %s27, 1
      %p88 = por %p86, %p87
      %p90 = scmp.ne.s32.totalorder %s73, %s89
      %p91 = scmp.eq.s32.totalorder %s27, 0
      %p92 = por %p90, %p91
      %s94 = sadd.s32 %s93, 1
      %p97 = scmp.eq.s32.totalorder %s21, 1
      %p98 = scmp.ne.s32.totalorder %s93, %s95
      %p99 = scmp.eq.s32.totalorder %s21, 0
      %p100 = por %p98, %p99
      %p101 = scmp.ne.s32.totalorder %s93, %s95
      %p102 = scmp.eq.s32.totalorder %s26, 1
      %p103 = por %p101, %p102
      %p104 = scmp.ne.s32.totalorder %s95, %s96
      %p105 = scmp.eq.s32.totalorder %s26, 0
      %p106 = por %p104, %p105
      %p107 = scmp.ne.s32.totalorder %s95, %s96
      %p108 = scmp.eq.s32.totalorder %s27, 1
      %p109 = por %p107, %p108
      %p111 = scmp.ne.s32.totalorder %s96, %s110
      %p112 = scmp.eq.s32.totalorder %s27, 0
      %p113 = por %p111, %p112
      %s115 = sadd.s32 %s114, 1
      %p118 = scmp.eq.s32.totalorder %s21, 1
      %p119 = scmp.ne.s32.totalorder %s114, %s116
      %p120 = scmp.eq.s32.totalorder %s21, 0
      %p121 = por %p119, %p120
      %p122 = scmp.ne.s32.totalorder %s114, %s116
      %p123 = scmp.eq.s32.totalorder %s26, 1
      %p124 = por %p122, %p123
      %p125 = scmp.ne.s32.totalorder %s116, %s117
      %p126 = scmp.eq.s32.totalorder %s26, 0
      %p127 = por %p125, %p126
      %p128 = scmp.ne.s32.totalorder %s116, %s117
      %p129 = scmp.eq.s32.totalorder %s27, 1
      %p130 = por %p128, %p129
      %p132 = scmp.ne.s32.totalorder %s117, %s131
      %p133 = scmp.eq.s32.totalorder %s27, 0
      %p134 = por %p132, %p133
      %s136 = sadd.s32 %s135, 1
      %p139 = scmp.eq.s32.totalorder %s21, 1
      %p140 = scmp.ne.s32.totalorder %s135, %s137
      %p141 = scmp.eq.s32.totalorder %s21, 0
      %p142 = por %p140, %p141
      %p143 = scmp.ne.s32.totalorder %s135, %s137
      %p144 = scmp.eq.s32.totalorder %s26, 1
      %p145 = por %p143, %p144
      %p146 = scmp.ne.s32.totalorder %s137, %s138
      %p147 = scmp.eq.s32.totalorder %s26, 0
      %p148 = por %p146, %p147
      %p149 = scmp.ne.s32.totalorder %s137, %s138
      %p150 = scmp.eq.s32.totalorder %s27, 1
      %p151 = por %p149, %p150
      %p153 = scmp.ne.s32.totalorder %s138, %s152
      %p154 = scmp.eq.s32.totalorder %s27, 0
      %p155 = por %p153, %p154
      %s157 = sadd.s32 %s156, 1
      %p160 = scmp.eq.s32.totalorder %s21, 1
      %p161 = scmp.ne.s32.totalorder %s156, %s158
      %p162 = scmp.eq.s32.totalorder %s21, 0
      %p163 = por %p161, %p162
      %p164 = scmp.ne.s32.totalorder %s156, %s158
      %p165 = scmp.eq.s32.totalorder %s26, 1
      %p166 = por %p164, %p165
      %p167 = scmp.ne.s32.totalorder %s158, %s159
      %p168 = scmp.eq.s32.totalorder %s26, 0
      %p169 = por %p167, %p168
      %p170 = scmp.ne.s32.totalorder %s158, %s159
      %p171 = scmp.eq.s32.totalorder %s27, 1
      %p172 = por %p170, %p171
      %p174 = scmp.ne.s32.totalorder %s159, %s173
      %p175 = scmp.eq.s32.totalorder %s27, 0
      %p176 = por %p174, %p175
      %s178 = sadd.s32 %s177, 1
      %p181 = scmp.eq.s32.totalorder %s21, 1
      %p182 = scmp.ne.s32.totalorder %s177, %s179
      %p183 = scmp.eq.s32.totalorder %s21, 0
      %p184 = por %p182, %p183
      %p185 = scmp.ne.s32.totalorder %s177, %s179
      %p186 = scmp.eq.s32.totalorder %s26, 1
      %p187 = por %p185, %p186
      %p188 = scmp.ne.s32.totalorder %s179, %s180
      %p189 = scmp.eq.s32.totalorder %s26, 0
      %p190 = por %p188, %p189
      %p191 = scmp.ne.s32.totalorder %s179, %s180
      %p192 = scmp.eq.s32.totalorder %s27, 1
      %p193 = por %p191, %p192
      %p195 = scmp.ne.s32.totalorder %s180, %s194
      %p196 = scmp.eq.s32.totalorder %s27, 0
      %p197 = por %p195, %p196
      %s199 = sadd.s32 %s198, 1
      %p202 = scmp.eq.s32.totalorder %s21, 1
      %p203 = scmp.ne.s32.totalorder %s198, %s200
      %p204 = scmp.eq.s32.totalorder %s21, 0
      %p205 = por %p203, %p204
      %p206 = scmp.ne.s32.totalorder %s198, %s200
      %p207 = scmp.eq.s32.totalorder %s26, 1
      %p208 = por %p206, %p207
      %p209 = scmp.ne.s32.totalorder %s200, %s201
      %p210 = scmp.eq.s32.totalorder %s26, 0
      %p211 = por %p209, %p210
      %p212 = scmp.ne.s32.totalorder %s200, %s201
      %p213 = scmp.eq.s32.totalorder %s27, 1
      %p214 = por %p212, %p213
      %p216 = scmp.ne.s32.totalorder %s201, %s215
      %p217 = scmp.eq.s32.totalorder %s27, 0
      %p218 = por %p216, %p217
      %s219 = ssub.s32 %s28, %s40
      %s220 = ssub.s32 %s29, %s36
      %s221 = sor.u32 %s219, %s220
      %p222 = scmp.eq.s32.totalorder %s221, 0
      %s224 = sadd.s32 %s223, 1
      %s225 = scalar_select %p222, %s223, %s224
      %p228 = pneg %p222
      %p229 = scmp.eq.s32.totalorder %s21, 1
      %p230 = por %p228, %p229
      %p231 = scmp.ne.s32.totalorder %s223, %s226
      %p232 = scmp.eq.s32.totalorder %s21, 0
      %p233 = por %p231, %p232
      %p234 = scmp.ne.s32.totalorder %s223, %s226
      %p235 = scmp.eq.s32.totalorder %s26, 1
      %p236 = por %p234, %p235
      %p237 = scmp.ne.s32.totalorder %s226, %s227
      %p238 = scmp.eq.s32.totalorder %s26, 0
      %p239 = por %p237, %p238
      %p240 = scmp.ne.s32.totalorder %s226, %s227
      %p241 = scmp.eq.s32.totalorder %s27, 1
      %p242 = por %p240, %p241
      %p244 = scmp.ne.s32.totalorder %s227, %s243
      %p245 = scmp.eq.s32.totalorder %s27, 0
      %p246 = por %p244, %p245
      %p247 = scmp.le.s32.totalorder 1, %s21
      %p248 = scmp.lt.s32.totalorder %s21, 3
      %p249 = pnand %p247, %p248
      %p250 = pneg %p249
      // Predicated region
      $region9: #{tpu_custom_call.1} parent=5 // pred_check
        _
      $region10: #{tpu_custom_call.1} parent=5 // pred_check_branch
        %252 = sbr.rel (%p249) target = $region12
      $region11: #{tpu_custom_call.1} parent=5 // pred_region
        %s253 = ssub.s32 %s21, 1
        // Predicated region
        $region13: #{tpu_custom_call.1} parent=11 // pred_check
          %p254 = pneg %p106
        $region14: #{tpu_custom_call.1} parent=11 // pred_check_branch
          %256 = sbr.rel (%p254) target = $region16
        $region15: #{tpu_custom_call.1} parent=11 // pred_region
          %s258 = ssub.s32 6144, 6144
          %259 = vsyncadd [#allocation10], %s258
          %s260 = sshll.u32 [#allocation9], 4
          %s261 = int_to_ptr.vmem [resolvable:$true] %s260
          %266 = dma.hbm_to_vmem [thread:$0]  %s2, 6144, %s261, [#allocation10], 384, 384, 24
        $region16: #{tpu_custom_call.1} parent=11 // pred_fallthru
          _
        // Predicated region
        $region17: #{tpu_custom_call.1} parent=11 // pred_check
          %p267 = pneg %p127
        $region18: #{tpu_custom_call.1} parent=11 // pred_check_branch
          %269 = sbr.rel (%p267) target = $region20
        $region19: #{tpu_custom_call.1} parent=11 // pred_region
          _
        $region20: #{tpu_custom_call.1} parent=11 // pred_fallthru
          _
        // Predicated region
        $region21: #{tpu_custom_call.1} parent=11 // pred_check
          %p270 = pneg %p148
        $region22: #{tpu_custom_call.1} parent=11 // pred_check_branch
          %272 = sbr.rel (%p270) target = $region24
        $region23: #{tpu_custom_call.1} parent=11 // pred_region
          %s274 = ssub.s32 2048, 2048
          %275 = vsyncadd [#allocation10], %s274
          %s276 = sshll.u32 [#allocation11], 4
          %s277 = int_to_ptr.vmem [resolvable:$true] %s276
          %282 = dma.hbm_to_vmem [thread:$0]  %s4, 2048, %s277, [#allocation10], 128, 128, 8
        $region24: #{tpu_custom_call.1} parent=11 // pred_fallthru
          _
        // Predicated region
        $region25: #{tpu_custom_call.1} parent=11 // pred_check
          %p283 = pneg %p169
        $region26: #{tpu_custom_call.1} parent=11 // pred_check_branch
          %285 = sbr.rel (%p283) target = $region28
        $region27: #{tpu_custom_call.1} parent=11 // pred_region
          _
        $region28: #{tpu_custom_call.1} parent=11 // pred_fallthru
          _
        // Predicated region
        $region29: #{tpu_custom_call.1} parent=11 // pred_check
          %p286 = pneg %p190
        $region30: #{tpu_custom_call.1} parent=11 // pred_check_branch
          %288 = sbr.rel (%p286) target = $region32
        $region31: #{tpu_custom_call.1} parent=11 // pred_region
          _
        $region32: #{tpu_custom_call.1} parent=11 // pred_fallthru
          _
        // Predicated region
        $region33: #{tpu_custom_call.1} parent=11 // pred_check
          %p289 = pneg %p211
        $region34: #{tpu_custom_call.1} parent=11 // pred_check_branch
          %291 = sbr.rel (%p289) target = $region36
        $region35: #{tpu_custom_call.1} parent=11 // pred_region
          _
        $region36: #{tpu_custom_call.1} parent=11 // pred_fallthru
          _
      $region12: #{tpu_custom_call.1} parent=5 // pred_fallthru
        _
      %p292 = scmp.lt.s32.totalorder %s21, 2
      // Predicated region
      $region37: #{tpu_custom_call.1} parent=5 // pred_check
        %p293 = pneg %p292
      $region38: #{tpu_custom_call.1} parent=5 // pred_check_branch
        %295 = sbr.rel (%p293) target = $region40
      $region39: #{tpu_custom_call.1} parent=5 // pred_region
        // Predicated region
        $region41: #{tpu_custom_call.1} parent=39 // pred_check
          %p296 = pneg %p53
        $region42: #{tpu_custom_call.1} parent=39 // pred_check_branch
          %298 = sbr.rel (%p296) target = $region44
        $region43: #{tpu_custom_call.1} parent=39 // pred_region
          %s299 = sand.u32 %s43, 1
          %s300 = scalar_lea.sflag [#allocation7], %s299
          %s301 = sand.u32 %s43, 1
          %s302 = smul.addr %s301, 16
          %s303 = scalar_lea.vmem [#allocation6], %s302
          %s305 = ssub.s32 256, 256
          %306 = vsyncadd %s300, %s305
          %s307 = smul.addr %s28, 2
          %s308 = smul.addr %s307, 128
          %s309 = scalar_lea.hbm %s0, %s308
          %s310 = sshll.u32 %s303, 4
          %s311 = int_to_ptr.vmem [resolvable:$true] %s310
          %316 = dma.hbm_to_vmem [thread:$0]  %s309, 256, %s311, %s300, 128, 128, 8
        $region44: #{tpu_custom_call.1} parent=39 // pred_fallthru
          _
        // Predicated region
        $region45: #{tpu_custom_call.1} parent=39 // pred_check
          %p317 = pneg %p79
        $region46: #{tpu_custom_call.1} parent=39 // pred_check_branch
          %319 = sbr.rel (%p317) target = $region48
        $region47: #{tpu_custom_call.1} parent=39 // pred_region
          %p320 = scmp.lt.s32.totalorder %s28, 1
          %s321 = scalar_select %p320, %s28, 1
          %s322 = scalar_lea.vmem %s1, %s321
        $region48: #{tpu_custom_call.1} parent=39 // pred_fallthru
          _
      $region40: #{tpu_custom_call.1} parent=5 // pred_fallthru
        _
      %p323 = scmp.le.s32.totalorder 1, %s21
      %p324 = scmp.lt.s32.totalorder %s21, 3
      %p325 = pnand %p323, %p324
      %p326 = pneg %p325
      // Predicated region
      $region49: #{tpu_custom_call.1} parent=5 // pred_check
        _
      $region50: #{tpu_custom_call.1} parent=5 // pred_check_branch
        %328 = sbr.rel (%p325) target = $region52
      $region51: #{tpu_custom_call.1} parent=5 // pred_region
        %s329 = ssub.s32 %s21, 1
        %s330 = sand.u32 %s46, 1
        %s331 = scalar_lea.sflag [#allocation7], %s330
        %s332 = sand.u32 %s46, 1
        %s333 = smul.addr %s332, 16
        %s334 = scalar_lea.vmem [#allocation6], %s333
        // Predicated region
        $region53: #{tpu_custom_call.1} parent=51 // pred_check
          %p335 = pneg %p59
        $region54: #{tpu_custom_call.1} parent=51 // pred_check_branch
          %337 = sbr.rel (%p335) target = $region56
        $region55: #{tpu_custom_call.1} parent=51 // pred_region
          %338 = dma.done %s331, 256
        $region56: #{tpu_custom_call.1} parent=51 // pred_fallthru
          _
        // Predicated region
        $region57: #{tpu_custom_call.1} parent=51 // pred_check
          %p339 = pneg %p106
        $region58: #{tpu_custom_call.1} parent=51 // pred_check_branch
          %341 = sbr.rel (%p339) target = $region60
        $region59: #{tpu_custom_call.1} parent=51 // pred_region
          %342 = dma.done [#allocation10], 6144
        $region60: #{tpu_custom_call.1} parent=51 // pred_fallthru
          _
        // Predicated region
        $region61: #{tpu_custom_call.1} parent=51 // pred_check
          %p343 = pneg %p148
        $region62: #{tpu_custom_call.1} parent=51 // pred_check_branch
          %345 = sbr.rel (%p343) target = $region64
        $region63: #{tpu_custom_call.1} parent=51 // pred_region
          %346 = dma.done [#allocation10], 2048
        $region64: #{tpu_custom_call.1} parent=51 // pred_fallthru
          _
        %s347 = sand.u32 %s46, 1
        %s348 = scalar_lea.sflag [#allocation7], %s347
        %s349 = sand.u32 %s46, 1
        %s350 = smul.addr %s349, 16
        %s351 = scalar_lea.vmem [#allocation6], %s350
        %p352 = pneg %p59
        %p353 = pneg %p56
        %p354 = scmp.lt.s32.totalorder %s30, 1
        %s355 = scalar_select %p354, %s30, 1
        %s356 = scalar_lea.vmem %s1, %s355
        %p357 = pneg %p85
        %p358 = pneg %p82
        %p359 = pneg %p106
        %p360 = pneg %p103
        %p361 = pneg %p127
        %p362 = pneg %p124
        %p363 = pneg %p148
        %p364 = pneg %p145
        %p365 = pneg %p169
        %p366 = pneg %p166
        %p367 = pneg %p190
        %p368 = pneg %p187
        %p369 = pneg %p211
        %p370 = pneg %p208
        %p371 = pneg %p239
        %p372 = pneg %p236
        %s373 = sand.u32 %s226, 1
        %s374 = scalar_lea.sflag [#allocation8], %s373
        %s375 = sand.u32 %s226, 1
        %s376 = smul.addr %s375, 16
        %s377 = scalar_lea.vmem [#allocation12], %s376
        %p378 = scmp.lt.s32.totalorder %s30, 1
        %s379 = scalar_select %p378, %s30, 1
        %s380 = scalar_lea.vmem %s1, %s379
        %s381 = smul.u32 2, %s31
        %p382 = scmp.eq.s32.totalorder %s31, 0
        // Predicated region
        $region65: #{tpu_custom_call.1} parent=51 // pred_check
          %p383 = pneg %p382
        $region66: #{tpu_custom_call.1} parent=51 // pred_check_branch
          %385 = sbr.rel (%p383) target = $region68
        $region67: #{tpu_custom_call.1} parent=51 // pred_region
          %v386 = vld [vmem:[%s334] sm:$0xff]
          %v387 = vld [vmem:[%s334 + $0x8] sm:$0xff]
          %v388 = vld [vmem:[#allocation9] sm:$0xff]
          %v389 = vld [vmem:[#allocation9 + $0x8] sm:$0xff]
          %v390 = vld [vmem:[#allocation9 + $0x10] sm:$0xff]
          %v391 = vld [vmem:[#allocation9 + $0x18] sm:$0xff]
          %v392 = vld [vmem:[#allocation9 + $0x20] sm:$0xff]
          %v393 = vld [vmem:[#allocation9 + $0x28] sm:$0xff]
          %v394 = vld [vmem:[#allocation9 + $0x30] sm:$0xff]
          %v395 = vld [vmem:[#allocation9 + $0x38] sm:$0xff]
          %v396 = vld [vmem:[#allocation9 + $0x40] sm:$0xff]
          %v397 = vld [vmem:[#allocation9 + $0x48] sm:$0xff]
          %v398 = vld [vmem:[#allocation9 + $0x50] sm:$0xff]
          %v399 = vld [vmem:[#allocation9 + $0x58] sm:$0xff]
          %v400 = vld [vmem:[#allocation9 + $0x60] sm:$0xff]
          %v401 = vld [vmem:[#allocation9 + $0x68] sm:$0xff]
          %v402 = vld [vmem:[#allocation9 + $0x70] sm:$0xff]
          %v403 = vld [vmem:[#allocation9 + $0x78] sm:$0xff]
          %v404 = vld [vmem:[#allocation9 + $0x80] sm:$0xff]
          %v405 = vld [vmem:[#allocation9 + $0x88] sm:$0xff]
          %v406 = vld [vmem:[#allocation9 + $0x90] sm:$0xff]
          %v407 = vld [vmem:[#allocation9 + $0x98] sm:$0xff]
          %v408 = vld [vmem:[#allocation9 + $0xa0] sm:$0xff]
          %v409 = vld [vmem:[#allocation9 + $0xa8] sm:$0xff]
          %v410 = vld [vmem:[#allocation9 + $0xb0] sm:$0xff]
          %v411 = vld [vmem:[#allocation9 + $0xb8] sm:$0xff]
          %v412 = vld [vmem:[#allocation9 + $0xc0] sm:$0xff]
          %v413 = vld [vmem:[#allocation9 + $0xc8] sm:$0xff]
          %v414 = vld [vmem:[#allocation9 + $0xd0] sm:$0xff]
          %v415 = vld [vmem:[#allocation9 + $0xd8] sm:$0xff]
          %v416 = vld [vmem:[#allocation9 + $0xe0] sm:$0xff]
          %v417 = vld [vmem:[#allocation9 + $0xe8] sm:$0xff]
          %v418 = vld [vmem:[#allocation9 + $0xf0] sm:$0xff]
          %v419 = vld [vmem:[#allocation9 + $0xf8] sm:$0xff]
          %v420 = vld [vmem:[#allocation9 + $0x100] sm:$0xff]
          %v421 = vld [vmem:[#allocation9 + $0x108] sm:$0xff]
          %v422 = vld [vmem:[#allocation9 + $0x110] sm:$0xff]
          %v423 = vld [vmem:[#allocation9 + $0x118] sm:$0xff]
          %v424 = vld [vmem:[#allocation9 + $0x120] sm:$0xff]
          %v425 = vld [vmem:[#allocation9 + $0x128] sm:$0xff]
          %v426 = vld [vmem:[#allocation9 + $0x130] sm:$0xff]
          %v427 = vld [vmem:[#allocation9 + $0x138] sm:$0xff]
          %v428 = vld [vmem:[#allocation9 + $0x140] sm:$0xff]
          %v429 = vld [vmem:[#allocation9 + $0x148] sm:$0xff]
          %v430 = vld [vmem:[#allocation9 + $0x150] sm:$0xff]
          %v431 = vld [vmem:[#allocation9 + $0x158] sm:$0xff]
          %v432 = vld [vmem:[#allocation9 + $0x160] sm:$0xff]
          %v433 = vld [vmem:[#allocation9 + $0x168] sm:$0xff]
          %v434 = vld [vmem:[#allocation9 + $0x170] sm:$0xff]
          %v435 = vld [vmem:[#allocation9 + $0x178] sm:$0xff]
          %v436 = vld [vmem:[%s3] sm:$0x7]
          %v438 = vlaneseq
          %v439 = vshrl.u32 %v438, 7
          %v440 = vsub.s32 0, %v439
          %v441 = vrot.slane %v436, %v440
          %v442 = vlaneseq
          %v443 = vshrl.u32 %v442, 7
          %v444 = vsub.s32 1, %v443
          %v445 = vrot.slane %v436, %v444
          %v446 = vlaneseq
          %v447 = vshrl.u32 %v446, 7
          %v448 = vsub.s32 2, %v447
          %v449 = vrot.slane %v436, %v448
          %453 = vmatprep.subr.mxu0 %v389
          %454 = vmatpush1.msra.mxu0 %v388
          %455 = vmatprep.subr.mxu0 %v392
          %456 = vmatpush1.msra.mxu0 %v391
          %457 = vmatprep.subr.mxu0 %v395
          %458 = vmatpush1.msra.mxu0 %v394
          %459 = vmatprep.subr.mxu0 %v398
          %460 = vmatpush1.msra.mxu0 %v397
          %461 = vmatprep.subr.mxu0 %v401
          %462 = vmatpush1.msra.mxu0 %v400
          %463 = vmatprep.subr.mxu0 %v404
          %464 = vmatpush1.msra.mxu0 %v403
          %465 = vmatprep.subr.mxu0 %v407
          %466 = vmatpush1.msra.mxu0 %v406
          %467 = vmatprep.subr.mxu0 %v410
          %468 = vmatpush1.msra.mxu0 %v409
          %469 = vmatprep.subr.mxu0 %v413
          %470 = vmatpush1.msra.mxu0 %v412
          %471 = vmatprep.subr.mxu0 %v416
          %472 = vmatpush1.msra.mxu0 %v415
          %473 = vmatprep.subr.mxu0 %v419
          %474 = vmatpush1.msra.mxu0 %v418
          %475 = vmatprep.subr.mxu0 %v422
          %476 = vmatpush1.msra.mxu0 %v421
          %477 = vmatprep.subr.mxu0 %v425
          %478 = vmatpush1.msra.mxu0 %v424
          %479 = vmatprep.subr.mxu0 %v428
          %480 = vmatpush1.msra.mxu0 %v427
          %481 = vmatprep.subr.mxu0 %v431
          %482 = vmatpush1.msra.mxu0 %v430
          %483 = vmatprep.subr.mxu0 %v434
          %484 = vmatpush1.msra.mxu0 %v433
          %485 = vmatprep.subr.mxu0 0.0
          %486 = vmatpush1.msra.mxu0 0.0
          %487 = vmatprep.subr.mxu0 0.0
          %488 = vmatpush1.msra.mxu0 0.0
          %489 = vmatprep.subr.mxu0 0.0
          %490 = vmatpush1.msra.mxu0 0.0
          %491 = vmatprep.subr.mxu0 0.0
          %492 = vmatpush1.msra.mxu0 0.0
          %493 = vmatprep.subr.mxu0 0.0
          %494 = vmatpush1.msra.mxu0 0.0
          %495 = vmatprep.subr.mxu0 0.0
          %496 = vmatpush1.msra.mxu0 0.0
          %497 = vmatprep.subr.mxu0 0.0
          %498 = vmatpush1.msra.mxu0 0.0
          %499 = vmatprep.subr.mxu0 0.0
          %500 = vmatpush1.msra.mxu0 0.0
          %501 = vmatprep.subr.mxu0 0.0
          %502 = vmatpush1.msra.mxu0 0.0
          %503 = vmatprep.subr.mxu0 0.0
          %504 = vmatpush1.msra.mxu0 0.0
          %505 = vmatprep.subr.mxu0 0.0
          %506 = vmatpush1.msra.mxu0 0.0
          %507 = vmatprep.subr.mxu0 0.0
          %508 = vmatpush1.msra.mxu0 0.0
          %509 = vmatprep.subr.mxu0 0.0
          %510 = vmatpush1.msra.mxu0 0.0
          %511 = vmatprep.subr.mxu0 0.0
          %512 = vmatpush1.msra.mxu0 0.0
          %513 = vmatprep.subr.mxu0 0.0
          %514 = vmatpush1.msra.mxu0 0.0
          %515 = vmatprep.subr.mxu0 0.0
          %516 = vmatpush1.msra.mxu0 0.0
          %517 = vmatprep.mubr.f32.mxu0 0.0
          %518 = vmatmul.mubr.f32.gmra.mrb[0].mxu0 %v386
          %v519 = vpop.f32.mrb[0].mxu0
          %v520 = vadd.f32 %v441, %v519
          %v521 = vpop.f32.mrb[0].mxu0
          %v522 = vadd.f32 %v445, %v521
          %523 = vmatprep.mubr.f32.mxu0 0.0
          %524 = vmatmul.mubr.f32.gmra.mrb[0].mxu0 %v387
          %v525 = vpop.f32.mrb[0].mxu0
          %v526 = vadd.f32 %v441, %v525
          %v527 = vpop.f32.mrb[0].mxu0
          %v528 = vadd.f32 %v445, %v527
          %529 = vdwg.mxu0
          %530 = vmatprep.subr.mxu0 0.0
          %531 = vmatpush1.msra.mxu0 %v390
          %532 = vmatprep.subr.mxu0 0.0
          %533 = vmatpush1.msra.mxu0 %v393
          %534 = vmatprep.subr.mxu0 0.0
          %535 = vmatpush1.msra.mxu0 %v396
          %536 = vmatprep.subr.mxu0 0.0
          %537 = vmatpush1.msra.mxu0 %v399
          %538 = vmatprep.subr.mxu0 0.0
          %539 = vmatpush1.msra.mxu0 %v402
          %540 = vmatprep.subr.mxu0 0.0
          %541 = vmatpush1.msra.mxu0 %v405
          %542 = vmatprep.subr.mxu0 0.0
          %543 = vmatpush1.msra.mxu0 %v408
          %544 = vmatprep.subr.mxu0 0.0
          %545 = vmatpush1.msra.mxu0 %v411
          %546 = vmatprep.subr.mxu0 0.0
          %547 = vmatpush1.msra.mxu0 %v414
          %548 = vmatprep.subr.mxu0 0.0
          %549 = vmatpush1.msra.mxu0 %v417
          %550 = vmatprep.subr.mxu0 0.0
          %551 = vmatpush1.msra.mxu0 %v420
          %552 = vmatprep.subr.mxu0 0.0
          %553 = vmatpush1.msra.mxu0 %v423
          %554 = vmatprep.subr.mxu0 0.0
          %555 = vmatpush1.msra.mxu0 %v426
          %556 = vmatprep.subr.mxu0 0.0
          %557 = vmatpush1.msra.mxu0 %v429
          %558 = vmatprep.subr.mxu0 0.0
          %559 = vmatpush1.msra.mxu0 %v432
          %560 = vmatprep.subr.mxu0 0.0
          %561 = vmatpush1.msra.mxu0 %v435
          %562 = vmatprep.subr.mxu0 0.0
          %563 = vmatpush1.msra.mxu0 0.0
          %564 = vmatprep.subr.mxu0 0.0
          %565 = vmatpush1.msra.mxu0 0.0
          %566 = vmatprep.subr.mxu0 0.0
          %567 = vmatpush1.msra.mxu0 0.0
          %568 = vmatprep.subr.mxu0 0.0
          %569 = vmatpush1.msra.mxu0 0.0
          %570 = vmatprep.subr.mxu0 0.0
          %571 = vmatpush1.msra.mxu0 0.0
          %572 = vmatprep.subr.mxu0 0.0
          %573 = vmatpush1.msra.mxu0 0.0
          %574 = vmatprep.subr.mxu0 0.0
          %575 = vmatpush1.msra.mxu0 0.0
          %576 = vmatprep.subr.mxu0 0.0
          %577 = vmatpush1.msra.mxu0 0.0
          %578 = vmatprep.subr.mxu0 0.0
          %579 = vmatpush1.msra.mxu0 0.0
          %580 = vmatprep.subr.mxu0 0.0
          %581 = vmatpush1.msra.mxu0 0.0
          %582 = vmatprep.subr.mxu0 0.0
          %583 = vmatpush1.msra.mxu0 0.0
          %584 = vmatprep.subr.mxu0 0.0
          %585 = vmatpush1.msra.mxu0 0.0
          %586 = vmatprep.subr.mxu0 0.0
          %587 = vmatpush1.msra.mxu0 0.0
          %588 = vmatprep.subr.mxu0 0.0
          %589 = vmatpush1.msra.mxu0 0.0
          %590 = vmatprep.subr.mxu0 0.0
          %591 = vmatpush1.msra.mxu0 0.0
          %592 = vmatprep.subr.mxu0 0.0
          %593 = vmatpush1.msra.mxu0 0.0
          %594 = vmatprep.mubr.f32.mxu0 0.0
          %595 = vmatmul.mubr.f32.gmra.mrb[0].mxu0 %v386
          %v596 = vpop.f32.mrb[0].mxu0
          %v597 = vadd.f32 %v449, %v596
          %v598 = vpop.f32.mrb[0].mxu0
          %599 = vmatprep.mubr.f32.mxu0 0.0
          %600 = vmatmul.mubr.f32.gmra.mrb[0].mxu0 %v387
          %v601 = vpop.f32.mrb[0].mxu0
          %v602 = vadd.f32 %v449, %v601
          %v603 = vpop.f32.mrb[0].mxu0
          %604 = vdwg.mxu0
          %605 = vst [vmem:[#allocation2] sm:$0xff] %v520
          %606 = vst [vmem:[#allocation2 + $0x8] sm:$0xff] %v526
          %607 = vst [vmem:[#allocation4] sm:$0xff] %v597
          %608 = vst [vmem:[#allocation4 + $0x8] sm:$0xff] %v602
          %609 = vxpose.xlu0.b32.start [1/16] %v522, 128
          %610 = vxpose.xlu0.b32.cont [2/16] %v528, 128
          %611 = vxpose.xlu0.b32.cont [3/16] 0.0, 128
          %612 = vxpose.xlu0.b32.cont [4/16] 0.0, 128
          %613 = vxpose.xlu0.b32.cont [5/16] 0.0, 128
          %614 = vxpose.xlu0.b32.cont [6/16] 0.0, 128
          %615 = vxpose.xlu0.b32.cont [7/16] 0.0, 128
          %616 = vxpose.xlu0.b32.cont [8/16] 0.0, 128
          %617 = vxpose.xlu0.b32.cont [9/16] 0.0, 128
          %618 = vxpose.xlu0.b32.cont [10/16] 0.0, 128
          %619 = vxpose.xlu0.b32.cont [11/16] 0.0, 128
          %620 = vxpose.xlu0.b32.cont [12/16] 0.0, 128
          %621 = vxpose.xlu0.b32.cont [13/16] 0.0, 128
          %622 = vxpose.xlu0.b32.cont [14/16] 0.0, 128
          %623 = vxpose.xlu0.b32.cont [15/16] 0.0, 128
          %624 = vxpose.xlu0.b32.end [16/16] 0.0, 128
          %v625 = vpop.trf.xlu0
          %v626 = vpop.trf.xlu0
          %v627 = vpop.trf.xlu0
          %v628 = vpop.trf.xlu0
          %v629 = vpop.trf.xlu0
          %v630 = vpop.trf.xlu0
          %v631 = vpop.trf.xlu0
          %v632 = vpop.trf.xlu0
          %v633 = vpop.trf.xlu0
          %v634 = vpop.trf.xlu0
          %v635 = vpop.trf.xlu0
          %v636 = vpop.trf.xlu0
          %v637 = vpop.trf.xlu0
          %v638 = vpop.trf.xlu0
          %v639 = vpop.trf.xlu0
          %v640 = vpop.trf.xlu0
          %vm641 = vcmask 130048
          %642 = vst.msk [vmem:[#allocation3] sm:$0xff] %vm641, %v625
          %643 = vst.msk [vmem:[#allocation3 + $0x8] sm:$0xff] %vm641, %v626
          %644 = vst.msk [vmem:[#allocation3 + $0x10] sm:$0xff] %vm641, %v627
          %645 = vst.msk [vmem:[#allocation3 + $0x18] sm:$0xff] %vm641, %v628
          %646 = vst.msk [vmem:[#allocation3 + $0x20] sm:$0xff] %vm641, %v629
          %647 = vst.msk [vmem:[#allocation3 + $0x28] sm:$0xff] %vm641, %v630
          %648 = vst.msk [vmem:[#allocation3 + $0x30] sm:$0xff] %vm641, %v631
          %649 = vst.msk [vmem:[#allocation3 + $0x38] sm:$0xff] %vm641, %v632
          %650 = vst.msk [vmem:[#allocation3 + $0x40] sm:$0xff] %vm641, %v633
          %651 = vst.msk [vmem:[#allocation3 + $0x48] sm:$0xff] %vm641, %v634
          %652 = vst.msk [vmem:[#allocation3 + $0x50] sm:$0xff] %vm641, %v635
          %653 = vst.msk [vmem:[#allocation3 + $0x58] sm:$0xff] %vm641, %v636
          %654 = vst.msk [vmem:[#allocation3 + $0x60] sm:$0xff] %vm641, %v637
          %655 = vst.msk [vmem:[#allocation3 + $0x68] sm:$0xff] %vm641, %v638
          %656 = vst.msk [vmem:[#allocation3 + $0x70] sm:$0xff] %vm641, %v639
          %657 = vst.msk [vmem:[#allocation3 + $0x78] sm:$0xff] %vm641, %v640
        $region68: #{tpu_custom_call.1} parent=51 // pred_fallthru
          _
        %s658 = smul.u32 %s31, 16
        %s659 = scalar_lea.vmem %s334, %s658 [#allocation6]
        %v660 = vld [vmem:[%s659] sm:$0xff]
        %v661 = vld [vmem:[%s659 + $0x8] sm:$0xff]
        %s662 = scalar_lea.vmem [#allocation2], %s658
        %v663 = vld [vmem:[%s662] sm:$0xff]
        %v664 = vld [vmem:[%s662 + $0x8] sm:$0xff]
        %v665 = vld [vmem:[%s380] sm:$0x1]
        %v666 = vld [vmem:[#allocation3] sm:$0xff]
        %v667 = vld [vmem:[#allocation3 + $0x8] sm:$0xff]
        %v668 = vld [vmem:[#allocation3 + $0x10] sm:$0xff]
        %v669 = vld [vmem:[#allocation3 + $0x18] sm:$0xff]
        %v670 = vld [vmem:[#allocation4] sm:$0xff]
        %v671 = vld [vmem:[#allocation4 + $0x8] sm:$0xff]
        %v673 = vlaneseq
        %v674 = vshrl.u32 %v673, 7
        %v675 = vsub.s32 0, %v674
        %v676 = vrot.slane %v665, %v675
        %vm678 = vcmask 261120
        %v680 = vsel %vm678, %v663, 0
        %v683 = vsel %vm678, %v664, 0
        %685 = vmatprep.subr.mxu0 0.0
        %686 = vmatpush1.msra.mxu0 %v666
        %687 = vmatprep.subr.mxu0 0.0
        %688 = vmatpush1.msra.mxu0 %v667
        %689 = vmatprep.subr.mxu0 0.0
        %690 = vmatpush1.msra.mxu0 %v668
        %691 = vmatprep.subr.mxu0 0.0
        %692 = vmatpush1.msra.mxu0 %v669
        %693 = vmatprep.subr.mxu0 0.0
        %694 = vmatpush1.msra.mxu0 0.0
        %695 = vmatprep.subr.mxu0 0.0
        %696 = vmatpush1.msra.mxu0 0.0
        %697 = vmatprep.subr.mxu0 0.0
        %698 = vmatpush1.msra.mxu0 0.0
        %699 = vmatprep.subr.mxu0 0.0
        %700 = vmatpush1.msra.mxu0 0.0
        %701 = vmatprep.subr.mxu0 0.0
        %702 = vmatpush1.msra.mxu0 0.0
        %703 = vmatprep.subr.mxu0 0.0
        %704 = vmatpush1.msra.mxu0 0.0
        %705 = vmatprep.subr.mxu0 0.0
        %706 = vmatpush1.msra.mxu0 0.0
        %707 = vmatprep.subr.mxu0 0.0
        %708 = vmatpush1.msra.mxu0 0.0
        %709 = vmatprep.subr.mxu0 0.0
        %710 = vmatpush1.msra.mxu0 0.0
        %711 = vmatprep.subr.mxu0 0.0
        %712 = vmatpush1.msra.mxu0 0.0
        %713 = vmatprep.subr.mxu0 0.0
        %714 = vmatpush1.msra.mxu0 0.0
        %715 = vmatprep.subr.mxu0 0.0
        %716 = vmatpush1.msra.mxu0 0.0
        %717 = vmatprep.subr.mxu0 0.0
        %718 = vmatpush1.msra.mxu0 0.0
        %719 = vmatprep.subr.mxu0 0.0
        %720 = vmatpush1.msra.mxu0 0.0
        %721 = vmatprep.subr.mxu0 0.0
        %722 = vmatpush1.msra.mxu0 0.0
        %723 = vmatprep.subr.mxu0 0.0
        %724 = vmatpush1.msra.mxu0 0.0
        %725 = vmatprep.subr.mxu0 0.0
        %726 = vmatpush1.msra.mxu0 0.0
        %727 = vmatprep.subr.mxu0 0.0
        %728 = vmatpush1.msra.mxu0 0.0
        %729 = vmatprep.subr.mxu0 0.0
        %730 = vmatpush1.msra.mxu0 0.0
        %731 = vmatprep.subr.mxu0 0.0
        %732 = vmatpush1.msra.mxu0 0.0
        %733 = vmatprep.subr.mxu0 0.0
        %734 = vmatpush1.msra.mxu0 0.0
        %735 = vmatprep.subr.mxu0 0.0
        %736 = vmatpush1.msra.mxu0 0.0
        %737 = vmatprep.subr.mxu0 0.0
        %738 = vmatpush1.msra.mxu0 0.0
        %739 = vmatprep.subr.mxu0 0.0
        %740 = vmatpush1.msra.mxu0 0.0
        %741 = vmatprep.subr.mxu0 0.0
        %742 = vmatpush1.msra.mxu0 0.0
        %743 = vmatprep.subr.mxu0 0.0
        %744 = vmatpush1.msra.mxu0 0.0
        %745 = vmatprep.subr.mxu0 0.0
        %746 = vmatpush1.msra.mxu0 0.0
        %747 = vmatprep.subr.mxu0 0.0
        %748 = vmatpush1.msra.mxu0 0.0
        %749 = vmatprep.mubr.f32.mxu0 0.0
        %750 = vmatmul.mubr.f32.gmra.mrb[0].mxu0 %v680
        %v751 = vpop.f32.mrb[0].mxu0
        %v752 = vadd.f32 %v676, %v751
        %v753 = vpop.f32.mrb[0].mxu0
        %754 = vmatprep.mubr.f32.mxu0 0.0
        %755 = vmatmul.mubr.f32.gmra.mrb[0].mxu0 %v683
        %v756 = vpop.f32.mrb[0].mxu0
        %v757 = vadd.f32 %v676, %v756
        %v758 = vpop.f32.mrb[0].mxu0
        %759 = vdwg.mxu0
        %vm760 = vcmask 130048
        %v761 = vsel %vm760, %v752, -inf
        %762 = vmax.xlane.f32.xlu0 %v761
        %v763 = vpop.xlane.xlu0 %762
        %v764 = vsel %vm760, %v757, -inf
        %765 = vmax.xlane.f32.xlu0 %v764
        %v766 = vpop.xlane.xlu0 %765
        %v767 = vsub.f32 %v752, %v763
        %v768 = vsub.f32 %v757, %v766
        %v769 = vmul.f32 %v767, 1.442695
        %v770 = vpow.pop %v769
        %v771 = vmul.f32 %v768, 1.442695
        %v772 = vpow.pop %v771
        %v773 = vsel %vm760, %v770, 0.0
        %774 = vadd.xlane.f32.xlu0 %v773
        %v775 = vpop.xlane.xlu0 %774
        %v776 = vsel %vm760, %v772, 0.0
        %777 = vadd.xlane.f32.xlu0 %v776
        %v778 = vpop.xlane.xlu0 %777
        %v779 = vrcp.pop %v775
        %v780 = vrcp.pop %v778
        %v782 = vsel %vm760, %v770, 0
        %v785 = vsel %vm760, %v772, 0
        %787 = vmatprep.subr.mxu0 0.0
        %788 = vmatpush1.msra.mxu0 %v670
        %789 = vmatprep.subr.mxu0 0.0
        %790 = vmatpush1.msra.mxu0 %v671
        %791 = vmatprep.subr.mxu0 0.0
        %792 = vmatpush1.msra.mxu0 0.0
        %793 = vmatprep.subr.mxu0 0.0
        %794 = vmatpush1.msra.mxu0 0.0
        %795 = vmatprep.subr.mxu0 0.0
        %796 = vmatpush1.msra.mxu0 0.0
        %797 = vmatprep.subr.mxu0 0.0
        %798 = vmatpush1.msra.mxu0 0.0
        %799 = vmatprep.subr.mxu0 0.0
        %800 = vmatpush1.msra.mxu0 0.0
        %801 = vmatprep.subr.mxu0 0.0
        %802 = vmatpush1.msra.mxu0 0.0
        %803 = vmatprep.subr.mxu0 0.0
        %804 = vmatpush1.msra.mxu0 0.0
        %805 = vmatprep.subr.mxu0 0.0
        %806 = vmatpush1.msra.mxu0 0.0
        %807 = vmatprep.subr.mxu0 0.0
        %808 = vmatpush1.msra.mxu0 0.0
        %809 = vmatprep.subr.mxu0 0.0
        %810 = vmatpush1.msra.mxu0 0.0
        %811 = vmatprep.subr.mxu0 0.0
        %812 = vmatpush1.msra.mxu0 0.0
        %813 = vmatprep.subr.mxu0 0.0
        %814 = vmatpush1.msra.mxu0 0.0
        %815 = vmatprep.subr.mxu0 0.0
        %816 = vmatpush1.msra.mxu0 0.0
        %817 = vmatprep.subr.mxu0 0.0
        %818 = vmatpush1.msra.mxu0 0.0
        %819 = vmatprep.subr.mxu0 0.0
        %820 = vmatpush1.msra.mxu0 0.0
        %821 = vmatprep.subr.mxu0 0.0
        %822 = vmatpush1.msra.mxu0 0.0
        %823 = vmatprep.subr.mxu0 0.0
        %824 = vmatpush1.msra.mxu0 0.0
        %825 = vmatprep.subr.mxu0 0.0
        %826 = vmatpush1.msra.mxu0 0.0
        %827 = vmatprep.subr.mxu0 0.0
        %828 = vmatpush1.msra.mxu0 0.0
        %829 = vmatprep.subr.mxu0 0.0
        %830 = vmatpush1.msra.mxu0 0.0
        %831 = vmatprep.subr.mxu0 0.0
        %832 = vmatpush1.msra.mxu0 0.0
        %833 = vmatprep.subr.mxu0 0.0
        %834 = vmatpush1.msra.mxu0 0.0
        %835 = vmatprep.subr.mxu0 0.0
        %836 = vmatpush1.msra.mxu0 0.0
        %837 = vmatprep.subr.mxu0 0.0
        %838 = vmatpush1.msra.mxu0 0.0
        %839 = vmatprep.subr.mxu0 0.0
        %840 = vmatpush1.msra.mxu0 0.0
        %841 = vmatprep.subr.mxu0 0.0
        %842 = vmatpush1.msra.mxu0 0.0
        %843 = vmatprep.subr.mxu0 0.0
        %844 = vmatpush1.msra.mxu0 0.0
        %845 = vmatprep.subr.mxu0 0.0
        %846 = vmatpush1.msra.mxu0 0.0
        %847 = vmatprep.subr.mxu0 0.0
        %848 = vmatpush1.msra.mxu0 0.0
        %849 = vmatprep.subr.mxu0 0.0
        %850 = vmatpush1.msra.mxu0 0.0
        %851 = vmatprep.mubr.f32.mxu0 0.0
        %852 = vmatmul.mubr.f32.gmra.mrb[0].mxu0 %v782
        %v853 = vpop.f32.mrb[0].mxu0
        %v854 = vadd.f32 0.0, %v853
        %v855 = vpop.f32.mrb[0].mxu0
        %856 = vmatprep.mubr.f32.mxu0 0.0
        %857 = vmatmul.mubr.f32.gmra.mrb[0].mxu0 %v785
        %v858 = vpop.f32.mrb[0].mxu0
        %v859 = vadd.f32 0.0, %v858
        %v860 = vpop.f32.mrb[0].mxu0
        %861 = vdwg.mxu0
        %v862 = vmul.f32 %v854, %v779
        %v863 = vmul.f32 %v859, %v780
        %864 = vst.msk [vmem:[#allocation5] sm:$0xff] %vm678, %v862
        %865 = vst.msk [vmem:[#allocation5 + $0x8] sm:$0xff] %vm678, %v863
        %v866 = vld [vmem:[#allocation3 + $0x20] sm:$0xff]
        %v867 = vld [vmem:[#allocation3 + $0x28] sm:$0xff]
        %v868 = vld [vmem:[#allocation3 + $0x30] sm:$0xff]
        %v869 = vld [vmem:[#allocation3 + $0x38] sm:$0xff]
        %v870 = vld [vmem:[#allocation4] sm:$0xff]
        %v871 = vld [vmem:[#allocation4 + $0x8] sm:$0xff]
        %872 = vrot.lane.b32.xlu0 %v663, 96
        %v873 = vpop.permute.xlu0 %872
        %874 = vrot.lane.b32.xlu0 %v664, 96
        %v875 = vpop.permute.xlu0 %874
        %v876 = vsel %vm678, %v873, 0
        %v878 = vsel %vm678, %v875, 0
        %880 = vmatprep.subr.mxu0 0.0
        %881 = vmatpush1.msra.mxu0 %v866
        %882 = vmatprep.subr.mxu0 0.0
        %883 = vmatpush1.msra.mxu0 %v867
        %884 = vmatprep.subr.mxu0 0.0
        %885 = vmatpush1.msra.mxu0 %v868
        %886 = vmatprep.subr.mxu0 0.0
        %887 = vmatpush1.msra.mxu0 %v869
        %888 = vmatprep.subr.mxu0 0.0
        %889 = vmatpush1.msra.mxu0 0.0
        %890 = vmatprep.subr.mxu0 0.0
        %891 = vmatpush1.msra.mxu0 0.0
        %892 = vmatprep.subr.mxu0 0.0
        %893 = vmatpush1.msra.mxu0 0.0
        %894 = vmatprep.subr.mxu0 0.0
        %895 = vmatpush1.msra.mxu0 0.0
        %896 = vmatprep.subr.mxu0 0.0
        %897 = vmatpush1.msra.mxu0 0.0
        %898 = vmatprep.subr.mxu0 0.0
        %899 = vmatpush1.msra.mxu0 0.0
        %900 = vmatprep.subr.mxu0 0.0
        %901 = vmatpush1.msra.mxu0 0.0
        %902 = vmatprep.subr.mxu0 0.0
        %903 = vmatpush1.msra.mxu0 0.0
        %904 = vmatprep.subr.mxu0 0.0
        %905 = vmatpush1.msra.mxu0 0.0
        %906 = vmatprep.subr.mxu0 0.0
        %907 = vmatpush1.msra.mxu0 0.0
        %908 = vmatprep.subr.mxu0 0.0
        %909 = vmatpush1.msra.mxu0 0.0
        %910 = vmatprep.subr.mxu0 0.0
        %911 = vmatpush1.msra.mxu0 0.0
        %912 = vmatprep.subr.mxu0 0.0
        %913 = vmatpush1.msra.mxu0 0.0
        %914 = vmatprep.subr.mxu0 0.0
        %915 = vmatpush1.msra.mxu0 0.0
        %916 = vmatprep.subr.mxu0 0.0
        %917 = vmatpush1.msra.mxu0 0.0
        %918 = vmatprep.subr.mxu0 0.0
        %919 = vmatpush1.msra.mxu0 0.0
        %920 = vmatprep.subr.mxu0 0.0
        %921 = vmatpush1.msra.mxu0 0.0
        %922 = vmatprep.subr.mxu0 0.0
        %923 = vmatpush1.msra.mxu0 0.0
        %924 = vmatprep.subr.mxu0 0.0
        %925 = vmatpush1.msra.mxu0 0.0
        %926 = vmatprep.subr.mxu0 0.0
        %927 = vmatpush1.msra.mxu0 0.0
        %928 = vmatprep.subr.mxu0 0.0
        %929 = vmatpush1.msra.mxu0 0.0
        %930 = vmatprep.subr.mxu0 0.0
        %931 = vmatpush1.msra.mxu0 0.0
        %932 = vmatprep.subr.mxu0 0.0
        %933 = vmatpush1.msra.mxu0 0.0
        %934 = vmatprep.subr.mxu0 0.0
        %935 = vmatpush1.msra.mxu0 0.0
        %936 = vmatprep.subr.mxu0 0.0
        %937 = vmatpush1.msra.mxu0 0.0
        %938 = vmatprep.subr.mxu0 0.0
        %939 = vmatpush1.msra.mxu0 0.0
        %940 = vmatprep.subr.mxu0 0.0
        %941 = vmatpush1.msra.mxu0 0.0
        %942 = vmatprep.subr.mxu0 0.0
        %943 = vmatpush1.msra.mxu0 0.0
        %944 = vmatprep.mubr.f32.mxu0 0.0
        %945 = vmatmul.mubr.f32.gmra.mrb[0].mxu0 %v876
        %v946 = vpop.f32.mrb[0].mxu0
        %v947 = vadd.f32 %v676, %v946
        %v948 = vpop.f32.mrb[0].mxu0
        %949 = vmatprep.mubr.f32.mxu0 0.0
        %950 = vmatmul.mubr.f32.gmra.mrb[0].mxu0 %v878
        %v951 = vpop.f32.mrb[0].mxu0
        %v952 = vadd.f32 %v676, %v951
        %v953 = vpop.f32.mrb[0].mxu0
        %954 = vdwg.mxu0
        %v955 = vsel %vm760, %v947, -inf
        %956 = vmax.xlane.f32.xlu0 %v955
        %v957 = vpop.xlane.xlu0 %956
        %v958 = vsel %vm760, %v952, -inf
        %959 = vmax.xlane.f32.xlu0 %v958
        %v960 = vpop.xlane.xlu0 %959
        %v961 = vsub.f32 %v947, %v957
        %v962 = vsub.f32 %v952, %v960
        %v963 = vmul.f32 %v961, 1.442695
        %v964 = vpow.pop %v963
        %v965 = vmul.f32 %v962, 1.442695
        %v966 = vpow.pop %v965
        %v967 = vsel %vm760, %v964, 0.0
        %968 = vadd.xlane.f32.xlu0 %v967
        %v969 = vpop.xlane.xlu0 %968
        %v970 = vsel %vm760, %v966, 0.0
        %971 = vadd.xlane.f32.xlu0 %v970
        %v972 = vpop.xlane.xlu0 %971
        %v973 = vrcp.pop %v969
        %v974 = vrcp.pop %v972
        %977 = vrot.lane.b32.xlu0 %v870, 96
        %v978 = vpop.permute.xlu0 %977
        %979 = vrot.lane.b32.xlu0 %v871, 96
        %v980 = vpop.permute.xlu0 %979
        %v984 = vsel %vm760, %v964, 0
        %v987 = vsel %vm760, %v966, 0
        %989 = vmatprep.subr.mxu0 0.0
        %990 = vmatpush1.msra.mxu0 %v978
        %991 = vmatprep.subr.mxu0 0.0
        %992 = vmatpush1.msra.mxu0 %v980
        %993 = vmatprep.subr.mxu0 0.0
        %994 = vmatpush1.msra.mxu0 0.0
        %995 = vmatprep.subr.mxu0 0.0
        %996 = vmatpush1.msra.mxu0 0.0
        %997 = vmatprep.subr.mxu0 0.0
        %998 = vmatpush1.msra.mxu0 0.0
        %999 = vmatprep.subr.mxu0 0.0
        %1000 = vmatpush1.msra.mxu0 0.0
        %1001 = vmatprep.subr.mxu0 0.0
        %1002 = vmatpush1.msra.mxu0 0.0
        %1003 = vmatprep.subr.mxu0 0.0
        %1004 = vmatpush1.msra.mxu0 0.0
        %1005 = vmatprep.subr.mxu0 0.0
        %1006 = vmatpush1.msra.mxu0 0.0
        %1007 = vmatprep.subr.mxu0 0.0
        %1008 = vmatpush1.msra.mxu0 0.0
        %1009 = vmatprep.subr.mxu0 0.0
        %1010 = vmatpush1.msra.mxu0 0.0
        %1011 = vmatprep.subr.mxu0 0.0
        %1012 = vmatpush1.msra.mxu0 0.0
        %1013 = vmatprep.subr.mxu0 0.0
        %1014 = vmatpush1.msra.mxu0 0.0
        %1015 = vmatprep.subr.mxu0 0.0
        %1016 = vmatpush1.msra.mxu0 0.0
        %1017 = vmatprep.subr.mxu0 0.0
        %1018 = vmatpush1.msra.mxu0 0.0
        %1019 = vmatprep.subr.mxu0 0.0
        %1020 = vmatpush1.msra.mxu0 0.0
        %1021 = vmatprep.subr.mxu0 0.0
        %1022 = vmatpush1.msra.mxu0 0.0
        %1023 = vmatprep.subr.mxu0 0.0
        %1024 = vmatpush1.msra.mxu0 0.0
        %1025 = vmatprep.subr.mxu0 0.0
        %1026 = vmatpush1.msra.mxu0 0.0
        %1027 = vmatprep.subr.mxu0 0.0
        %1028 = vmatpush1.msra.mxu0 0.0
        %1029 = vmatprep.subr.mxu0 0.0
        %1030 = vmatpush1.msra.mxu0 0.0
        %1031 = vmatprep.subr.mxu0 0.0
        %1032 = vmatpush1.msra.mxu0 0.0
        %1033 = vmatprep.subr.mxu0 0.0
        %1034 = vmatpush1.msra.mxu0 0.0
        %1035 = vmatprep.subr.mxu0 0.0
        %1036 = vmatpush1.msra.mxu0 0.0
        %1037 = vmatprep.subr.mxu0 0.0
        %1038 = vmatpush1.msra.mxu0 0.0
        %1039 = vmatprep.subr.mxu0 0.0
        %1040 = vmatpush1.msra.mxu0 0.0
        %1041 = vmatprep.subr.mxu0 0.0
        %1042 = vmatpush1.msra.mxu0 0.0
        %1043 = vmatprep.subr.mxu0 0.0
        %1044 = vmatpush1.msra.mxu0 0.0
        %1045 = vmatprep.subr.mxu0 0.0
        %1046 = vmatpush1.msra.mxu0 0.0
        %1047 = vmatprep.subr.mxu0 0.0
        %1048 = vmatpush1.msra.mxu0 0.0
        %1049 = vmatprep.subr.mxu0 0.0
        %1050 = vmatpush1.msra.mxu0 0.0
        %1051 = vmatprep.subr.mxu0 0.0
        %1052 = vmatpush1.msra.mxu0 0.0
        %1053 = vmatprep.mubr.f32.mxu0 0.0
        %1054 = vmatmul.mubr.f32.gmra.mrb[0].mxu0 %v984
        %v1055 = vpop.f32.mrb[0].mxu0
        %v1056 = vadd.f32 0.0, %v1055
        %v1057 = vpop.f32.mrb[0].mxu0
        %1058 = vmatprep.mubr.f32.mxu0 0.0
        %1059 = vmatmul.mubr.f32.gmra.mrb[0].mxu0 %v987
        %v1060 = vpop.f32.mrb[0].mxu0
        %v1061 = vadd.f32 0.0, %v1060
        %v1062 = vpop.f32.mrb[0].mxu0
        %1063 = vdwg.mxu0
        %v1064 = vmul.f32 %v1056, %v973
        %v1065 = vmul.f32 %v1061, %v974
        %1068 = vrot.lane.b32.xlu0 %v1064, 32
        %v1069 = vpop.permute.xlu0 %1068
        %1070 = vrot.lane.b32.xlu0 %v1065, 32
        %v1071 = vpop.permute.xlu0 %1070
        %vm1074 = vcmask 523520
        %1075 = vst.msk [vmem:[#allocation5] sm:$0xff] %vm1074, %v1069
        %1076 = vst.msk [vmem:[#allocation5 + $0x8] sm:$0xff] %vm1074, %v1071
        %v1077 = vld [vmem:[#allocation3 + $0x40] sm:$0xff]
        %v1078 = vld [vmem:[#allocation3 + $0x48] sm:$0xff]
        %v1079 = vld [vmem:[#allocation3 + $0x50] sm:$0xff]
        %v1080 = vld [vmem:[#allocation3 + $0x58] sm:$0xff]
        %v1081 = vld [vmem:[#allocation4] sm:$0xff]
        %v1082 = vld [vmem:[#allocation4 + $0x8] sm:$0xff]
        %1083 = vrot.lane.b32.xlu0 %v663, 64
        %v1084 = vpop.permute.xlu0 %1083
        %1085 = vrot.lane.b32.xlu0 %v664, 64
        %v1086 = vpop.permute.xlu0 %1085
        %v1087 = vsel %vm678, %v1084, 0
        %v1089 = vsel %vm678, %v1086, 0
        %1091 = vmatprep.subr.mxu0 0.0
        %1092 = vmatpush1.msra.mxu0 %v1077
        %1093 = vmatprep.subr.mxu0 0.0
        %1094 = vmatpush1.msra.mxu0 %v1078
        %1095 = vmatprep.subr.mxu0 0.0
        %1096 = vmatpush1.msra.mxu0 %v1079
        %1097 = vmatprep.subr.mxu0 0.0
        %1098 = vmatpush1.msra.mxu0 %v1080
        %1099 = vmatprep.subr.mxu0 0.0
        %1100 = vmatpush1.msra.mxu0 0.0
        %1101 = vmatprep.subr.mxu0 0.0
        %1102 = vmatpush1.msra.mxu0 0.0
        %1103 = vmatprep.subr.mxu0 0.0
        %1104 = vmatpush1.msra.mxu0 0.0
        %1105 = vmatprep.subr.mxu0 0.0
        %1106 = vmatpush1.msra.mxu0 0.0
        %1107 = vmatprep.subr.mxu0 0.0
        %1108 = vmatpush1.msra.mxu0 0.0
        %1109 = vmatprep.subr.mxu0 0.0
        %1110 = vmatpush1.msra.mxu0 0.0
        %1111 = vmatprep.subr.mxu0 0.0
        %1112 = vmatpush1.msra.mxu0 0.0
        %1113 = vmatprep.subr.mxu0 0.0
        %1114 = vmatpush1.msra.mxu0 0.0
        %1115 = vmatprep.subr.mxu0 0.0
        %1116 = vmatpush1.msra.mxu0 0.0
        %1117 = vmatprep.subr.mxu0 0.0
        %1118 = vmatpush1.msra.mxu0 0.0
        %1119 = vmatprep.subr.mxu0 0.0
        %1120 = vmatpush1.msra.mxu0 0.0
        %1121 = vmatprep.subr.mxu0 0.0
        %1122 = vmatpush1.msra.mxu0 0.0
        %1123 = vmatprep.subr.mxu0 0.0
        %1124 = vmatpush1.msra.mxu0 0.0
        %1125 = vmatprep.subr.mxu0 0.0
        %1126 = vmatpush1.msra.mxu0 0.0
        %1127 = vmatprep.subr.mxu0 0.0
        %1128 = vmatpush1.msra.mxu0 0.0
        %1129 = vmatprep.subr.mxu0 0.0
        %1130 = vmatpush1.msra.mxu0 0.0
        %1131 = vmatprep.subr.mxu0 0.0
        %1132 = vmatpush1.msra.mxu0 0.0
        %1133 = vmatprep.subr.mxu0 0.0
        %1134 = vmatpush1.msra.mxu0 0.0
        %1135 = vmatprep.subr.mxu0 0.0
        %1136 = vmatpush1.msra.mxu0 0.0
        %1137 = vmatprep.subr.mxu0 0.0
        %1138 = vmatpush1.msra.mxu0 0.0
        %1139 = vmatprep.subr.mxu0 0.0
        %1140 = vmatpush1.msra.mxu0 0.0
        %1141 = vmatprep.subr.mxu0 0.0
        %1142 = vmatpush1.msra.mxu0 0.0
        %1143 = vmatprep.subr.mxu0 0.0
        %1144 = vmatpush1.msra.mxu0 0.0
        %1145 = vmatprep.subr.mxu0 0.0
        %1146 = vmatpush1.msra.mxu0 0.0
        %1147 = vmatprep.subr.mxu0 0.0
        %1148 = vmatpush1.msra.mxu0 0.0
        %1149 = vmatprep.subr.mxu0 0.0
        %1150 = vmatpush1.msra.mxu0 0.0
        %1151 = vmatprep.subr.mxu0 0.0
        %1152 = vmatpush1.msra.mxu0 0.0
        %1153 = vmatprep.subr.mxu0 0.0
        %1154 = vmatpush1.msra.mxu0 0.0
        %1155 = vmatprep.mubr.f32.mxu0 0.0
        %1156 = vmatmul.mubr.f32.gmra.mrb[0].mxu0 %v1087
        %v1157 = vpop.f32.mrb[0].mxu0
        %v1158 = vadd.f32 %v676, %v1157
        %v1159 = vpop.f32.mrb[0].mxu0
        %1160 = vmatprep.mubr.f32.mxu0 0.0
        %1161 = vmatmul.mubr.f32.gmra.mrb[0].mxu0 %v1089
        %v1162 = vpop.f32.mrb[0].mxu0
        %v1163 = vadd.f32 %v676, %v1162
        %v1164 = vpop.f32.mrb[0].mxu0
        %1165 = vdwg.mxu0
        %v1166 = vsel %vm760, %v1158, -inf
        %1167 = vmax.xlane.f32.xlu0 %v1166
        %v1168 = vpop.xlane.xlu0 %1167
        %v1169 = vsel %vm760, %v1163, -inf
        %1170 = vmax.xlane.f32.xlu0 %v1169
        %v1171 = vpop.xlane.xlu0 %1170
        %v1172 = vsub.f32 %v1158, %v1168
        %v1173 = vsub.f32 %v1163, %v1171
        %v1174 = vmul.f32 %v1172, 1.442695
        %v1175 = vpow.pop %v1174
        %v1176 = vmul.f32 %v1173, 1.442695
        %v1177 = vpow.pop %v1176
        %v1178 = vsel %vm760, %v1175, 0.0
        %1179 = vadd.xlane.f32.xlu0 %v1178
        %v1180 = vpop.xlane.xlu0 %1179
        %v1181 = vsel %vm760, %v1177, 0.0
        %1182 = vadd.xlane.f32.xlu0 %v1181
        %v1183 = vpop.xlane.xlu0 %1182
        %v1184 = vrcp.pop %v1180
        %v1185 = vrcp.pop %v1183
        %1188 = vrot.lane.b32.xlu0 %v1081, 64
        %v1189 = vpop.permute.xlu0 %1188
        %1190 = vrot.lane.b32.xlu0 %v1082, 64
        %v1191 = vpop.permute.xlu0 %1190
        %v1195 = vsel %vm760, %v1175, 0
        %v1198 = vsel %vm760, %v1177, 0
        %1200 = vmatprep.subr.mxu0 0.0
        %1201 = vmatpush1.msra.mxu0 %v1189
        %1202 = vmatprep.subr.mxu0 0.0
        %1203 = vmatpush1.msra.mxu0 %v1191
        %1204 = vmatprep.subr.mxu0 0.0
        %1205 = vmatpush1.msra.mxu0 0.0
        %1206 = vmatprep.subr.mxu0 0.0
        %1207 = vmatpush1.msra.mxu0 0.0
        %1208 = vmatprep.subr.mxu0 0.0
        %1209 = vmatpush1.msra.mxu0 0.0
        %1210 = vmatprep.subr.mxu0 0.0
        %1211 = vmatpush1.msra.mxu0 0.0
        %1212 = vmatprep.subr.mxu0 0.0
        %1213 = vmatpush1.msra.mxu0 0.0
        %1214 = vmatprep.subr.mxu0 0.0
        %1215 = vmatpush1.msra.mxu0 0.0
        %1216 = vmatprep.subr.mxu0 0.0
        %1217 = vmatpush1.msra.mxu0 0.0
        %1218 = vmatprep.subr.mxu0 0.0
        %1219 = vmatpush1.msra.mxu0 0.0
        %1220 = vmatprep.subr.mxu0 0.0
        %1221 = vmatpush1.msra.mxu0 0.0
        %1222 = vmatprep.subr.mxu0 0.0
        %1223 = vmatpush1.msra.mxu0 0.0
        %1224 = vmatprep.subr.mxu0 0.0
        %1225 = vmatpush1.msra.mxu0 0.0
        %1226 = vmatprep.subr.mxu0 0.0
        %1227 = vmatpush1.msra.mxu0 0.0
        %1228 = vmatprep.subr.mxu0 0.0
        %1229 = vmatpush1.msra.mxu0 0.0
        %1230 = vmatprep.subr.mxu0 0.0
        %1231 = vmatpush1.msra.mxu0 0.0
        %1232 = vmatprep.subr.mxu0 0.0
        %1233 = vmatpush1.msra.mxu0 0.0
        %1234 = vmatprep.subr.mxu0 0.0
        %1235 = vmatpush1.msra.mxu0 0.0
        %1236 = vmatprep.subr.mxu0 0.0
        %1237 = vmatpush1.msra.mxu0 0.0
        %1238 = vmatprep.subr.mxu0 0.0
        %1239 = vmatpush1.msra.mxu0 0.0
        %1240 = vmatprep.subr.mxu0 0.0
        %1241 = vmatpush1.msra.mxu0 0.0
        %1242 = vmatprep.subr.mxu0 0.0
        %1243 = vmatpush1.msra.mxu0 0.0
        %1244 = vmatprep.subr.mxu0 0.0
        %1245 = vmatpush1.msra.mxu0 0.0
        %1246 = vmatprep.subr.mxu0 0.0
        %1247 = vmatpush1.msra.mxu0 0.0
        %1248 = vmatprep.subr.mxu0 0.0
        %1249 = vmatpush1.msra.mxu0 0.0
        %1250 = vmatprep.subr.mxu0 0.0
        %1251 = vmatpush1.msra.mxu0 0.0
        %1252 = vmatprep.subr.mxu0 0.0
        %1253 = vmatpush1.msra.mxu0 0.0
        %1254 = vmatprep.subr.mxu0 0.0
        %1255 = vmatpush1.msra.mxu0 0.0
        %1256 = vmatprep.subr.mxu0 0.0
        %1257 = vmatpush1.msra.mxu0 0.0
        %1258 = vmatprep.subr.mxu0 0.0
        %1259 = vmatpush1.msra.mxu0 0.0
        %1260 = vmatprep.subr.mxu0 0.0
        %1261 = vmatpush1.msra.mxu0 0.0
        %1262 = vmatprep.subr.mxu0 0.0
        %1263 = vmatpush1.msra.mxu0 0.0
        %1264 = vmatprep.mubr.f32.mxu0 0.0
        %1265 = vmatmul.mubr.f32.gmra.mrb[0].mxu0 %v1195
        %v1266 = vpop.f32.mrb[0].mxu0
        %v1267 = vadd.f32 0.0, %v1266
        %v1268 = vpop.f32.mrb[0].mxu0
        %1269 = vmatprep.mubr.f32.mxu0 0.0
        %1270 = vmatmul.mubr.f32.gmra.mrb[0].mxu0 %v1198
        %v1271 = vpop.f32.mrb[0].mxu0
        %v1272 = vadd.f32 0.0, %v1271
        %v1273 = vpop.f32.mrb[0].mxu0
        %1274 = vdwg.mxu0
        %v1275 = vmul.f32 %v1267, %v1184
        %v1276 = vmul.f32 %v1272, %v1185
        %1279 = vrot.lane.b32.xlu0 %v1275, 64
        %v1280 = vpop.permute.xlu0 %1279
        %1281 = vrot.lane.b32.xlu0 %v1276, 64
        %v1282 = vpop.permute.xlu0 %1281
        %vm1285 = vcmask 785920
        %1286 = vst.msk [vmem:[#allocation5] sm:$0xff] %vm1285, %v1280
        %1287 = vst.msk [vmem:[#allocation5 + $0x8] sm:$0xff] %vm1285, %v1282
        %v1288 = vld [vmem:[#allocation3 + $0x60] sm:$0xff]
        %v1289 = vld [vmem:[#allocation3 + $0x68] sm:$0xff]
        %v1290 = vld [vmem:[#allocation3 + $0x70] sm:$0xff]
        %v1291 = vld [vmem:[#allocation3 + $0x78] sm:$0xff]
        %v1292 = vld [vmem:[#allocation4] sm:$0xff]
        %v1293 = vld [vmem:[#allocation4 + $0x8] sm:$0xff]
        %1294 = vrot.lane.b32.xlu0 %v663, 32
        %v1295 = vpop.permute.xlu0 %1294
        %1296 = vrot.lane.b32.xlu0 %v664, 32
        %v1297 = vpop.permute.xlu0 %1296
        %v1298 = vsel %vm678, %v1295, 0
        %v1300 = vsel %vm678, %v1297, 0
        %1302 = vmatprep.subr.mxu0 0.0
        %1303 = vmatpush1.msra.mxu0 %v1288
        %1304 = vmatprep.subr.mxu0 0.0
        %1305 = vmatpush1.msra.mxu0 %v1289
        %1306 = vmatprep.subr.mxu0 0.0
        %1307 = vmatpush1.msra.mxu0 %v1290
        %1308 = vmatprep.subr.mxu0 0.0
        %1309 = vmatpush1.msra.mxu0 %v1291
        %1310 = vmatprep.subr.mxu0 0.0
        %1311 = vmatpush1.msra.mxu0 0.0
        %1312 = vmatprep.subr.mxu0 0.0
        %1313 = vmatpush1.msra.mxu0 0.0
        %1314 = vmatprep.subr.mxu0 0.0
        %1315 = vmatpush1.msra.mxu0 0.0
        %1316 = vmatprep.subr.mxu0 0.0
        %1317 = vmatpush1.msra.mxu0 0.0
        %1318 = vmatprep.subr.mxu0 0.0
        %1319 = vmatpush1.msra.mxu0 0.0
        %1320 = vmatprep.subr.mxu0 0.0
        %1321 = vmatpush1.msra.mxu0 0.0
        %1322 = vmatprep.subr.mxu0 0.0
        %1323 = vmatpush1.msra.mxu0 0.0
        %1324 = vmatprep.subr.mxu0 0.0
        %1325 = vmatpush1.msra.mxu0 0.0
        %1326 = vmatprep.subr.mxu0 0.0
        %1327 = vmatpush1.msra.mxu0 0.0
        %1328 = vmatprep.subr.mxu0 0.0
        %1329 = vmatpush1.msra.mxu0 0.0
        %1330 = vmatprep.subr.mxu0 0.0
        %1331 = vmatpush1.msra.mxu0 0.0
        %1332 = vmatprep.subr.mxu0 0.0
        %1333 = vmatpush1.msra.mxu0 0.0
        %1334 = vmatprep.subr.mxu0 0.0
        %1335 = vmatpush1.msra.mxu0 0.0
        %1336 = vmatprep.subr.mxu0 0.0
        %1337 = vmatpush1.msra.mxu0 0.0
        %1338 = vmatprep.subr.mxu0 0.0
        %1339 = vmatpush1.msra.mxu0 0.0
        %1340 = vmatprep.subr.mxu0 0.0
        %1341 = vmatpush1.msra.mxu0 0.0
        %1342 = vmatprep.subr.mxu0 0.0
        %1343 = vmatpush1.msra.mxu0 0.0
        %1344 = vmatprep.subr.mxu0 0.0
        %1345 = vmatpush1.msra.mxu0 0.0
        %1346 = vmatprep.subr.mxu0 0.0
        %1347 = vmatpush1.msra.mxu0 0.0
        %1348 = vmatprep.subr.mxu0 0.0
        %1349 = vmatpush1.msra.mxu0 0.0
        %1350 = vmatprep.subr.mxu0 0.0
        %1351 = vmatpush1.msra.mxu0 0.0
        %1352 = vmatprep.subr.mxu0 0.0
        %1353 = vmatpush1.msra.mxu0 0.0
        %1354 = vmatprep.subr.mxu0 0.0
        %1355 = vmatpush1.msra.mxu0 0.0
        %1356 = vmatprep.subr.mxu0 0.0
        %1357 = vmatpush1.msra.mxu0 0.0
        %1358 = vmatprep.subr.mxu0 0.0
        %1359 = vmatpush1.msra.mxu0 0.0
        %1360 = vmatprep.subr.mxu0 0.0
        %1361 = vmatpush1.msra.mxu0 0.0
        %1362 = vmatprep.subr.mxu0 0.0
        %1363 = vmatpush1.msra.mxu0 0.0
        %1364 = vmatprep.subr.mxu0 0.0
        %1365 = vmatpush1.msra.mxu0 0.0
        %1366 = vmatprep.mubr.f32.mxu0 0.0
        %1367 = vmatmul.mubr.f32.gmra.mrb[0].mxu0 %v1298
        %v1368 = vpop.f32.mrb[0].mxu0
        %v1369 = vadd.f32 %v676, %v1368
        %v1370 = vpop.f32.mrb[0].mxu0
        %1371 = vmatprep.mubr.f32.mxu0 0.0
        %1372 = vmatmul.mubr.f32.gmra.mrb[0].mxu0 %v1300
        %v1373 = vpop.f32.mrb[0].mxu0
        %v1374 = vadd.f32 %v676, %v1373
        %v1375 = vpop.f32.mrb[0].mxu0
        %1376 = vdwg.mxu0
        %v1377 = vsel %vm760, %v1369, -inf
        %1378 = vmax.xlane.f32.xlu0 %v1377
        %v1379 = vpop.xlane.xlu0 %1378
        %v1380 = vsel %vm760, %v1374, -inf
        %1381 = vmax.xlane.f32.xlu0 %v1380
        %v1382 = vpop.xlane.xlu0 %1381
        %v1383 = vsub.f32 %v1369, %v1379
        %v1384 = vsub.f32 %v1374, %v1382
        %v1385 = vmul.f32 %v1383, 1.442695
        %v1386 = vpow.pop %v1385
        %v1387 = vmul.f32 %v1384, 1.442695
        %v1388 = vpow.pop %v1387
        %v1389 = vsel %vm760, %v1386, 0.0
        %1390 = vadd.xlane.f32.xlu0 %v1389
        %v1391 = vpop.xlane.xlu0 %1390
        %v1392 = vsel %vm760, %v1388, 0.0
        %1393 = vadd.xlane.f32.xlu0 %v1392
        %v1394 = vpop.xlane.xlu0 %1393
        %v1395 = vrcp.pop %v1391
        %v1396 = vrcp.pop %v1394
        %1399 = vrot.lane.b32.xlu0 %v1292, 32
        %v1400 = vpop.permute.xlu0 %1399
        %1401 = vrot.lane.b32.xlu0 %v1293, 32
        %v1402 = vpop.permute.xlu0 %1401
        %v1406 = vsel %vm760, %v1386, 0
        %v1409 = vsel %vm760, %v1388, 0
        %1411 = vmatprep.subr.mxu0 0.0
        %1412 = vmatpush1.msra.mxu0 %v1400
        %1413 = vmatprep.subr.mxu0 0.0
        %1414 = vmatpush1.msra.mxu0 %v1402
        %1415 = vmatprep.subr.mxu0 0.0
        %1416 = vmatpush1.msra.mxu0 0.0
        %1417 = vmatprep.subr.mxu0 0.0
        %1418 = vmatpush1.msra.mxu0 0.0
        %1419 = vmatprep.subr.mxu0 0.0
        %1420 = vmatpush1.msra.mxu0 0.0
        %1421 = vmatprep.subr.mxu0 0.0
        %1422 = vmatpush1.msra.mxu0 0.0
        %1423 = vmatprep.subr.mxu0 0.0
        %1424 = vmatpush1.msra.mxu0 0.0
        %1425 = vmatprep.subr.mxu0 0.0
        %1426 = vmatpush1.msra.mxu0 0.0
        %1427 = vmatprep.subr.mxu0 0.0
        %1428 = vmatpush1.msra.mxu0 0.0
        %1429 = vmatprep.subr.mxu0 0.0
        %1430 = vmatpush1.msra.mxu0 0.0
        %1431 = vmatprep.subr.mxu0 0.0
        %1432 = vmatpush1.msra.mxu0 0.0
        %1433 = vmatprep.subr.mxu0 0.0
        %1434 = vmatpush1.msra.mxu0 0.0
        %1435 = vmatprep.subr.mxu0 0.0
        %1436 = vmatpush1.msra.mxu0 0.0
        %1437 = vmatprep.subr.mxu0 0.0
        %1438 = vmatpush1.msra.mxu0 0.0
        %1439 = vmatprep.subr.mxu0 0.0
        %1440 = vmatpush1.msra.mxu0 0.0
        %1441 = vmatprep.subr.mxu0 0.0
        %1442 = vmatpush1.msra.mxu0 0.0
        %1443 = vmatprep.subr.mxu0 0.0
        %1444 = vmatpush1.msra.mxu0 0.0
        %1445 = vmatprep.subr.mxu0 0.0
        %1446 = vmatpush1.msra.mxu0 0.0
        %1447 = vmatprep.subr.mxu0 0.0
        %1448 = vmatpush1.msra.mxu0 0.0
        %1449 = vmatprep.subr.mxu0 0.0
        %1450 = vmatpush1.msra.mxu0 0.0
        %1451 = vmatprep.subr.mxu0 0.0
        %1452 = vmatpush1.msra.mxu0 0.0
        %1453 = vmatprep.subr.mxu0 0.0
        %1454 = vmatpush1.msra.mxu0 0.0
        %1455 = vmatprep.subr.mxu0 0.0
        %1456 = vmatpush1.msra.mxu0 0.0
        %1457 = vmatprep.subr.mxu0 0.0
        %1458 = vmatpush1.msra.mxu0 0.0
        %1459 = vmatprep.subr.mxu0 0.0
        %1460 = vmatpush1.msra.mxu0 0.0
        %1461 = vmatprep.subr.mxu0 0.0
        %1462 = vmatpush1.msra.mxu0 0.0
        %1463 = vmatprep.subr.mxu0 0.0
        %1464 = vmatpush1.msra.mxu0 0.0
        %1465 = vmatprep.subr.mxu0 0.0
        %1466 = vmatpush1.msra.mxu0 0.0
        %1467 = vmatprep.subr.mxu0 0.0
        %1468 = vmatpush1.msra.mxu0 0.0
        %1469 = vmatprep.subr.mxu0 0.0
        %1470 = vmatpush1.msra.mxu0 0.0
        %1471 = vmatprep.subr.mxu0 0.0
        %1472 = vmatpush1.msra.mxu0 0.0
        %1473 = vmatprep.subr.mxu0 0.0
        %1474 = vmatpush1.msra.mxu0 0.0
        %1475 = vmatprep.mubr.f32.mxu0 0.0
        %1476 = vmatmul.mubr.f32.gmra.mrb[0].mxu0 %v1406
        %v1477 = vpop.f32.mrb[0].mxu0
        %v1478 = vadd.f32 0.0, %v1477
        %v1479 = vpop.f32.mrb[0].mxu0
        %1480 = vmatprep.mubr.f32.mxu0 0.0
        %1481 = vmatmul.mubr.f32.gmra.mrb[0].mxu0 %v1409
        %v1482 = vpop.f32.mrb[0].mxu0
        %v1483 = vadd.f32 0.0, %v1482
        %v1484 = vpop.f32.mrb[0].mxu0
        %1485 = vdwg.mxu0
        %v1486 = vmul.f32 %v1478, %v1395
        %v1487 = vmul.f32 %v1483, %v1396
        %1490 = vrot.lane.b32.xlu0 %v1486, 96
        %v1491 = vpop.permute.xlu0 %1490
        %1492 = vrot.lane.b32.xlu0 %v1487, 96
        %v1493 = vpop.permute.xlu0 %1492
        %vm1496 = vcmask 1048320
        %1497 = vst.msk [vmem:[#allocation5] sm:$0xff] %vm1496, %v1491
        %1498 = vst.msk [vmem:[#allocation5 + $0x8] sm:$0xff] %vm1496, %v1493
        %v1499 = vld [vmem:[#allocation5] sm:$0xff]
        %v1500 = vld [vmem:[#allocation5 + $0x8] sm:$0xff]
        %v1501 = vld [vmem:[#allocation11] sm:$0xff]
        %v1502 = vld [vmem:[#allocation11 + $0x8] sm:$0xff]
        %v1503 = vld [vmem:[#allocation11 + $0x10] sm:$0xff]
        %v1504 = vld [vmem:[#allocation11 + $0x18] sm:$0xff]
        %v1505 = vld [vmem:[#allocation11 + $0x20] sm:$0xff]
        %v1506 = vld [vmem:[#allocation11 + $0x28] sm:$0xff]
        %v1507 = vld [vmem:[#allocation11 + $0x30] sm:$0xff]
        %v1508 = vld [vmem:[#allocation11 + $0x38] sm:$0xff]
        %v1509 = vld [vmem:[#allocation11 + $0x40] sm:$0xff]
        %v1510 = vld [vmem:[#allocation11 + $0x48] sm:$0xff]
        %v1511 = vld [vmem:[#allocation11 + $0x50] sm:$0xff]
        %v1512 = vld [vmem:[#allocation11 + $0x58] sm:$0xff]
        %v1513 = vld [vmem:[#allocation11 + $0x60] sm:$0xff]
        %v1514 = vld [vmem:[#allocation11 + $0x68] sm:$0xff]
        %v1515 = vld [vmem:[#allocation11 + $0x70] sm:$0xff]
        %v1516 = vld [vmem:[#allocation11 + $0x78] sm:$0xff]
        %v1517 = vld [vmem:[%s5] sm:$0x1]
        %v1519 = vlaneseq
        %v1520 = vshrl.u32 %v1519, 7
        %v1521 = vsub.s32 0, %v1520
        %v1522 = vrot.slane %v1517, %v1521
        %1524 = vmatprep.subr.mxu0 0.0
        %1525 = vmatpush1.msra.mxu0 %v1501
        %1526 = vmatprep.subr.mxu0 0.0
        %1527 = vmatpush1.msra.mxu0 %v1502
        %1528 = vmatprep.subr.mxu0 0.0
        %1529 = vmatpush1.msra.mxu0 %v1503
        %1530 = vmatprep.subr.mxu0 0.0
        %1531 = vmatpush1.msra.mxu0 %v1504
        %1532 = vmatprep.subr.mxu0 0.0
        %1533 = vmatpush1.msra.mxu0 %v1505
        %1534 = vmatprep.subr.mxu0 0.0
        %1535 = vmatpush1.msra.mxu0 %v1506
        %1536 = vmatprep.subr.mxu0 0.0
        %1537 = vmatpush1.msra.mxu0 %v1507
        %1538 = vmatprep.subr.mxu0 0.0
        %1539 = vmatpush1.msra.mxu0 %v1508
        %1540 = vmatprep.subr.mxu0 0.0
        %1541 = vmatpush1.msra.mxu0 %v1509
        %1542 = vmatprep.subr.mxu0 0.0
        %1543 = vmatpush1.msra.mxu0 %v1510
        %1544 = vmatprep.subr.mxu0 0.0
        %1545 = vmatpush1.msra.mxu0 %v1511
        %1546 = vmatprep.subr.mxu0 0.0
        %1547 = vmatpush1.msra.mxu0 %v1512
        %1548 = vmatprep.subr.mxu0 0.0
        %1549 = vmatpush1.msra.mxu0 %v1513
        %1550 = vmatprep.subr.mxu0 0.0
        %1551 = vmatpush1.msra.mxu0 %v1514
        %1552 = vmatprep.subr.mxu0 0.0
        %1553 = vmatpush1.msra.mxu0 %v1515
        %1554 = vmatprep.subr.mxu0 0.0
        %1555 = vmatpush1.msra.mxu0 %v1516
        %1556 = vmatprep.subr.mxu0 0.0
        %1557 = vmatpush1.msra.mxu0 0.0
        %1558 = vmatprep.subr.mxu0 0.0
        %1559 = vmatpush1.msra.mxu0 0.0
        %1560 = vmatprep.subr.mxu0 0.0
        %1561 = vmatpush1.msra.mxu0 0.0
        %1562 = vmatprep.subr.mxu0 0.0
        %1563 = vmatpush1.msra.mxu0 0.0
        %1564 = vmatprep.subr.mxu0 0.0
        %1565 = vmatpush1.msra.mxu0 0.0
        %1566 = vmatprep.subr.mxu0 0.0
        %1567 = vmatpush1.msra.mxu0 0.0
        %1568 = vmatprep.subr.mxu0 0.0
        %1569 = vmatpush1.msra.mxu0 0.0
        %1570 = vmatprep.subr.mxu0 0.0
        %1571 = vmatpush1.msra.mxu0 0.0
        %1572 = vmatprep.subr.mxu0 0.0
        %1573 = vmatpush1.msra.mxu0 0.0
        %1574 = vmatprep.subr.mxu0 0.0
        %1575 = vmatpush1.msra.mxu0 0.0
        %1576 = vmatprep.subr.mxu0 0.0
        %1577 = vmatpush1.msra.mxu0 0.0
        %1578 = vmatprep.subr.mxu0 0.0
        %1579 = vmatpush1.msra.mxu0 0.0
        %1580 = vmatprep.subr.mxu0 0.0
        %1581 = vmatpush1.msra.mxu0 0.0
        %1582 = vmatprep.subr.mxu0 0.0
        %1583 = vmatpush1.msra.mxu0 0.0
        %1584 = vmatprep.subr.mxu0 0.0
        %1585 = vmatpush1.msra.mxu0 0.0
        %1586 = vmatprep.subr.mxu0 0.0
        %1587 = vmatpush1.msra.mxu0 0.0
        %1588 = vmatprep.mubr.f32.mxu0 0.0
        %1589 = vmatmul.mubr.f32.gmra.mrb[0].mxu0 %v1499
        %v1590 = vpop.f32.mrb[0].mxu0
        %v1591 = vadd.f32 %v1522, %v1590
        %v1592 = vpop.f32.mrb[0].mxu0
        %1593 = vmatprep.mubr.f32.mxu0 0.0
        %1594 = vmatmul.mubr.f32.gmra.mrb[0].mxu0 %v1500
        %v1595 = vpop.f32.mrb[0].mxu0
        %v1596 = vadd.f32 %v1522, %v1595
        %v1597 = vpop.f32.mrb[0].mxu0
        %1598 = vdwg.mxu0
        %v1599 = vadd.f32 %v1591, %v660
        %v1600 = vadd.f32 %v1596, %v661
        %1601 = vadd.xlane.f32.xlu0 %v1599
        %v1602 = vpop.xlane.xlu0 %1601
        %1603 = vadd.xlane.f32.xlu0 %v1600
        %v1604 = vpop.xlane.xlu0 %1603
        %v1605 = vrcp.pop 128.0
        %v1606 = vmul.f32 %v1602, %v1605
        %v1607 = vmul.f32 %v1604, %v1605
        %v1608 = vsub.f32 %v1599, %v1606
        %v1609 = vsub.f32 %v1600, %v1607
        %v1610 = vmul.f32 %v1608, %v1608
        %v1611 = vmul.f32 %v1609, %v1609
        %1612 = vadd.xlane.f32.xlu0 %v1610
        %v1613 = vpop.xlane.xlu0 %1612
        %1614 = vadd.xlane.f32.xlu0 %v1611
        %v1615 = vpop.xlane.xlu0 %1614
        %v1616 = vmul.f32 %v1613, %v1605
        %v1617 = vmul.f32 %v1615, %v1605
        %v1618 = vadd.f32 %v1616, 1e-12
        %v1619 = vadd.f32 %v1617, 1e-12
        %v1620 = vrsqrt.pop %v1618
        %v1621 = vrsqrt.pop %v1619
        %v1622 = vmul.f32 %v1608, %v1620
        %v1623 = vmul.f32 %v1609, %v1621
        %v1624 = vld [vmem:[%s6] sm:$0x1]
        %v1626 = vlaneseq
        %v1627 = vshrl.u32 %v1626, 7
        %v1628 = vsub.s32 0, %v1627
        %v1629 = vrot.slane %v1624, %v1628
        %v1631 = vmul.f32 %v1622, %v1629
        %v1632 = vmul.f32 %v1623, %v1629
        %v1633 = vld [vmem:[%s7] sm:$0x1]
        %v1635 = vlaneseq
        %v1636 = vshrl.u32 %v1635, 7
        %v1637 = vsub.s32 0, %v1636
        %v1638 = vrot.slane %v1633, %v1637
        %v1640 = vadd.f32 %v1631, %v1638
        %v1641 = vadd.f32 %v1632, %v1638
        %1642 = vst [vmem:[%s377] sm:$0xff] %v1640
        %1643 = vst [vmem:[%s377 + $0x8] sm:$0xff] %v1641
        %s1644 = sand.u32 %s226, 1
        %s1645 = scalar_lea.sflag [#allocation8], %s1644
        %s1646 = sand.u32 %s226, 1
        %s1647 = smul.addr %s1646, 16
        %s1648 = scalar_lea.vmem [#allocation12], %s1647
        // Predicated region
        $region69: #{tpu_custom_call.1} parent=51 // pred_check
          %p1649 = pneg %p236
        $region70: #{tpu_custom_call.1} parent=51 // pred_check_branch
          %1651 = sbr.rel (%p1649) target = $region72
        $region71: #{tpu_custom_call.1} parent=51 // pred_region
          %s1652 = smul.u32 2, %s31
          %s1654 = ssub.s32 256, 256
          %1655 = vsyncadd %s1645, %s1654
          %s1656 = smul.addr %s30, 2
          %s1657 = sadd.s32 %s1652, %s1656
          %s1658 = smul.addr %s1657, 128
          %s1659 = scalar_lea.hbm %s8, %s1658
          %s1660 = sshll.u32 %s1648, 4
          %s1661 = int_to_ptr.vmem [resolvable:$true] %s1660
          %1666 = dma.vmem_to_hbm [thread:$0]  %s1661, 256, %s1659, %s1645, 128, 128, 8
        $region72: #{tpu_custom_call.1} parent=51 // pred_fallthru
          _
      $region52: #{tpu_custom_call.1} parent=5 // pred_fallthru
        _
      %p1667 = scmp.le.s32.totalorder 2, %s21
      // Predicated region
      $region73: #{tpu_custom_call.1} parent=5 // pred_check
        %p1668 = pneg %p1667
      $region74: #{tpu_custom_call.1} parent=5 // pred_check_branch
        %1670 = sbr.rel (%p1668) target = $region76
      $region75: #{tpu_custom_call.1} parent=5 // pred_region
        %s1671 = ssub.s32 %s21, 2
        // Predicated region
        $region77: #{tpu_custom_call.1} parent=75 // pred_check
          %p1672 = pneg %p242
        $region78: #{tpu_custom_call.1} parent=75 // pred_check_branch
          %1674 = sbr.rel (%p1672) target = $region80
        $region79: #{tpu_custom_call.1} parent=75 // pred_region
          %s1675 = sand.u32 %s227, 1
          %s1676 = scalar_lea.sflag [#allocation8], %s1675
          %s1677 = sand.u32 %s227, 1
          %s1678 = smul.addr %s1677, 16
          %s1679 = scalar_lea.vmem [#allocation12], %s1678
          %1680 = dma.done %s1676, 256
        $region80: #{tpu_custom_call.1} parent=75 // pred_fallthru
          _
      $region76: #{tpu_custom_call.1} parent=5 // pred_fallthru
        _
    $region6: #{tpu_custom_call.1} parent=1 // loop_footer
      %s25 = sadd.s32 1, %s21
    $region7: #{tpu_custom_call.1} parent=1 // loop_footer_branch
      %20 = sbr.rel target = $region3
    $region8: #{tpu_custom_call.1} parent=1 // loop_exit
      _
    %1681 = vsyncpa [#allocation7], 1
    %s1682 = scalar_lea.sflag [#allocation7], 1
    %1683 = vsyncpa %s1682, 1
    %1684 = vsyncpa [#allocation10], 1
    %1685 = vsyncpa [#allocation8], 1
    %s1686 = scalar_lea.sflag [#allocation8], 1
    %1687 = vsyncpa %s1686, 1

</llo_original>
